<compile_context>
chip_gen: v6e
topology: v6e:2x2x1
jax: 0.10.0
libtpu: 0.0.40
codegen_flags: <defaults>
</compile_context>

<pallas_src>
import functools

import jax
import jax.numpy as jnp
from jax import lax
from jax.experimental import pallas as pl
from jax.experimental.pallas import tpu as pltpu

EPS = 1e-5


def _round_up(x, m):
    return ((x + m - 1) // m) * m


# ---------------------------------------------------------------------------
# Pass 1: in-kernel im2col conv (bf16 MXU operands, f32 accumulation) + per-channel
# partial statistics.
#   w_ref   : (kh*kw, Cp, C_in) bf16     per-tap weight matrices
#   xa_ref  : (C_in, tm) bf16            current M-tile of the flat pixel matrix
#   xb_ref  : (C_in, tm) bf16            next M-tile (halo for the shifted taps)
#   mask_ref: (1, tm) f32                1.0 for valid output pixels, 0.0 otherwise
#   yT_ref  : (Cp, tm) bf16              pre-BN activations (channel-major, lane-dense)
#   s1/s2   : (1, Cp, 1) f32             per-core partial sum / sum-of-squares
# ---------------------------------------------------------------------------
def _conv_stats_kernel(w_ref, xa_ref, xb_ref, mask_ref, yT_ref, s1_ref, s2_ref,
                       *, tap_offsets):
    @pl.when(pl.program_id(1) == 0)
    def _init():
        s1_ref[...] = jnp.zeros_like(s1_ref)
        s2_ref[...] = jnp.zeros_like(s2_ref)

    tm = yT_ref.shape[1]
    # Current tile + next tile cover the (kh-1)*Wp + (kw-1) halo needed by the taps.
    big = jnp.concatenate([xa_ref[...], xb_ref[...]], axis=1)          # (C_in, 2*tm) bf16

    acc = jnp.zeros(yT_ref.shape, jnp.float32)
    for t, off in enumerate(tap_offsets):                              # static unroll
        acc = acc + jnp.dot(w_ref[t], big[:, off:off + tm],
                            preferred_element_type=jnp.float32)

    yb = acc.astype(yT_ref.dtype)                                      # bf16 storage
    yT_ref[...] = yb

    # Stats over *valid* pixels only, in f32, from the same rounded values pass 2 will see.
    yf = yb.astype(jnp.float32)
    ym = yf * mask_ref[...]
    s1_ref[...] += jnp.sum(ym, axis=1, keepdims=True)[None]
    s2_ref[...] += jnp.sum(ym * yf, axis=1, keepdims=True)[None]


# ---------------------------------------------------------------------------
# Pass 2: z = y*scale + shift ; SiLU(z) = h + h*tanh(h), h = z/2 (single EUP op).
# ---------------------------------------------------------------------------
def _bn_silu_kernel(yT_ref, scale_ref, shift_ref, o_ref):
    z = yT_ref[...].astype(jnp.float32) * scale_ref[...] + shift_ref[...]
    h = 0.5 * z
    o_ref[...] = (h + h * jnp.tanh(h)).astype(o_ref.dtype)


@functools.partial(jax.jit, static_argnames=("stride", "padding", "block_m"))
def conv_bn_silu(x, weight, bias, gamma, beta, *, stride=1, padding=0, block_m=2048):
    """x: (N, C_in, H, W) f32; weight: (C_out, C_in, kh, kw); returns NCHW f32."""
    n, c_in, h, w = x.shape
    c_out, _, kh, kw = weight.shape
    # Conv bias is cancelled exactly by training-mode BatchNorm's mean subtraction.
    del bias

    hp = h + 2 * padding
    wp = w + 2 * padding
    ho = (hp - kh) // stride + 1
    wo = (wp - kw) // stride + 1
    m_valid = n * ho * wo                 # pixels that contribute to BN stats / output
    m_dense = n * hp * wp                 # outputs are computed on the full padded grid

    cp = _round_up(c_out, 8)
    tap_offsets = tuple(di * wp + dj for di in range(kh) for dj in range(kw))
    max_off = tap_offsets[-1]

    tm = min(block_m, _round_up(m_dense, 128))
    tm = max(tm, _round_up(max_off, 128), 128)       # halo must fit in one extra tile
    grid_total = pl.cdiv(m_dense, tm)
    n_split = 2 if grid_total >= 2 else 1            # v7x: half of M per TensorCore
    grid_half = pl.cdiv(grid_total, n_split)
    mp = n_split * grid_half * tm

    # ---- wrapper-side layout prep (all on the 1x-sized input, cast to bf16 first) ----
    xt = jnp.transpose(x.astype(jnp.bfloat16), (1, 0, 2, 3))           # (C_in, N, H, W)
    xpad = jnp.pad(xt, ((0, 0), (0, 0), (padding, padding), (padding, padding)))
    x_flat = xpad.reshape(c_in, m_dense)
    x_flat = jnp.pad(x_flat, ((0, 0), (0, mp + tm - m_dense)))          # tail + halo block

    w_taps = jnp.transpose(weight, (2, 3, 0, 1)).reshape(kh * kw, c_out, c_in)
    w_taps = jnp.pad(w_taps, ((0, 0), (0, cp - c_out), (0, 0))).astype(jnp.bfloat16)

    hv = (jnp.arange(hp) % stride == 0) & (jnp.arange(hp) // stride < ho)
    wv = (jnp.arange(wp) % stride == 0) & (jnp.arange(wp) // stride < wo)
    mask2d = (hv[:, None] & wv[None, :]).astype(jnp.float32)            # (Hp, Wp)
    mask = jnp.broadcast_to(mask2d[None], (n, hp, wp)).reshape(1, m_dense)
    mask = jnp.pad(mask, ((0, 0), (0, mp - m_dense)))

    g_col = jnp.pad(gamma.astype(jnp.float32).reshape(c_out, 1), ((0, cp - c_out), (0, 0)))
    b_col = jnp.pad(beta.astype(jnp.float32).reshape(c_out, 1), ((0, cp - c_out), (0, 0)))

    # ---- Pass 1: conv + per-core partial stats ---------------------------------------
    yT, s1p, s2p = pl.pallas_call(
        functools.partial(_conv_stats_kernel, tap_offsets=tap_offsets),
        out_shape=(
            jax.ShapeDtypeStruct((cp, mp), jnp.bfloat16),
            jax.ShapeDtypeStruct((n_split, cp, 1), jnp.float32),
            jax.ShapeDtypeStruct((n_split, cp, 1), jnp.float32),
        ),
        grid=(n_split, grid_half),
        in_specs=[
            pl.BlockSpec((kh * kw, cp, c_in), lambda c, i: (0, 0, 0)),
            pl.BlockSpec((c_in, tm), lambda c, i: (0, c * grid_half + i)),
            pl.BlockSpec((c_in, tm), lambda c, i: (0, c * grid_half + i + 1)),
            pl.BlockSpec((1, tm), lambda c, i: (0, c * grid_half + i)),
        ],
        out_specs=(
            pl.BlockSpec((cp, tm), lambda c, i: (0, c * grid_half + i)),
            pl.BlockSpec((1, cp, 1), lambda c, i: (c, 0, 0)),
            pl.BlockSpec((1, cp, 1), lambda c, i: (c, 0, 0)),
        ),
        compiler_params=pltpu.CompilerParams(
            dimension_semantics=("parallel", "arbitrary")),
    )(w_taps, x_flat, x_flat, mask)

    # ---- Tiny per-channel BN constants (XLA, (cp,1) f32) -----------------------------
    inv_cnt = 1.0 / float(m_valid)
    mean = jnp.sum(s1p, axis=0) * inv_cnt
    var = jnp.maximum(jnp.sum(s2p, axis=0) * inv_cnt - mean * mean, 0.0)
    scale = g_col * lax.rsqrt(var + EPS)
    shift = b_col - mean * scale

    # ---- Pass 2: normalize + affine + SiLU, fully parallel over M tiles --------------
    out_T = pl.pallas_call(
        _bn_silu_kernel,
        out_shape=jax.ShapeDtypeStruct((cp, mp), jnp.float32),
        grid=(mp // tm,),
        in_specs=[
            pl.BlockSpec((cp, tm), lambda i: (0, i)),
            pl.BlockSpec((cp, 1), lambda i: (0, 0)),
            pl.BlockSpec((cp, 1), lambda i: (0, 0)),
        ],
        out_specs=pl.BlockSpec((cp, tm), lambda i: (0, i)),
        compiler_params=pltpu.CompilerParams(dimension_semantics=("parallel",)),
    )(yT, scale, shift)

    # (cp, mp) -> valid channels / pixels -> NCHW
    out = out_T[:c_out, :m_dense].reshape(c_out, n, hp, wp)
    out = out[:, :, 0:ho * stride:stride, 0:wo * stride:stride]
    return jnp.transpose(out, (1, 0, 2, 3))


# ---------------------------------------------------------------------------
# Pure-JAX reference (training-mode BatchNorm).
# ---------------------------------------------------------------------------
def _reference(x, weight, bias, gamma, beta, *, stride, padding, mimic_kernel=False):
    dn = ("NCHW", "OIHW", "NCHW")
    pad = [(padding, padding), (padding, padding)]
    if mimic_kernel:
        # Match the kernel's quantization: bf16 conv operands, bf16-rounded pre-BN
        # activations, no conv bias (cancelled by training-mode BN).
        y = lax.conv_general_dilated(
            x.astype(jnp.bfloat16), weight.astype(jnp.bfloat16),
            window_strides=(stride, stride), padding=pad, dimension_numbers=dn,
            preferred_element_type=jnp.float32)
        y = y.astype(jnp.bfloat16).astype(jnp.float32)
    else:
        y = lax.conv_general_dilated(
            x, weight, window_strides=(stride, stride), padding=pad,
            dimension_numbers=dn) + bias.reshape(1, -1, 1, 1)
    mean = jnp.mean(y, axis=(0, 2, 3), keepdims=True)
    var = jnp.mean((y - mean) ** 2, axis=(0, 2, 3), keepdims=True)
    z = (y - mean) * lax.rsqrt(var + EPS)
    z = z * gamma.reshape(1, -1, 1, 1) + beta.reshape(1, -1, 1, 1)
    return z * jax.nn.sigmoid(z)


def _check(key, n, h, w, *, stride, padding, in_channels=4, out_channels=8, kernel_size=3):
    kx, kw_, kb, kg, kbe = jax.random.split(key, 5)
    x = jax.random.normal(kx, (n, in_channels, h, w), dtype=jnp.float32)
    fan_in = in_channels * kernel_size * kernel_size
    weight = jax.random.normal(
        kw_, (out_channels, in_channels, kernel_size, kernel_size),
        dtype=jnp.float32) * (1.0 / fan_in ** 0.5)
    bias = jax.random.normal(kb, (out_channels,), dtype=jnp.float32) * 0.01
    gamma = 1.0 + 0.1 * jax.random.normal(kg, (out_channels,), dtype=jnp.float32)
    beta = 0.1 * jax.random.normal(kbe, (out_channels,), dtype=jnp.float32)

    out = conv_bn_silu(x, weight, bias, gamma, beta, stride=stride, padding=padding)
    out = jax.block_until_ready(out)

    ho = (h + 2 * padding - kernel_size) // stride + 1
    wo = (w + 2 * padding - kernel_size) // stride + 1
    assert out.shape == (n, out_channels, ho, wo), out.shape

    ref_q = _reference(x, weight, bias, gamma, beta, stride=stride, padding=padding,
                       mimic_kernel=True)
    ref_f = _reference(x, weight, bias, gamma, beta, stride=stride, padding=padding)
    err_q = float(jnp.max(jnp.abs(out - ref_q)))
    err_f = float(jnp.max(jnp.abs(out - ref_f)))
    assert err_q < 5e-3, (n, h, w, stride, padding, err_q)
    assert err_f < 1e-1, (n, h, w, stride, padding, err_f)


if __name__ == "__main__":
    key = jax.random.PRNGKey(0)
    keys = jax.random.split(key, 5)

    # ConvBnSiLu(in_channels=4, out_channels=8, kernel_size=3, stride=1, padding=1)
    _check(keys[0], 2, 16, 16, stride=1, padding=1)   # single M tile
    _check(keys[1], 2, 32, 32, stride=1, padding=1)   # 2 M tiles -> two-core split path
    _check(keys[2], 2, 48, 48, stride=1, padding=1)   # multi-step stats accumulation
    _check(keys[3], 2, 16, 16, stride=1, padding=0)   # module-default padding
    _check(keys[4], 2, 16, 16, stride=2, padding=1)   # strided conv (mask + subsample)

    print("KERNEL_OK")
</pallas_src>

<mosaic_0001>
module attributes {stable_mosaic.version = 11 : i64} {
  func.func @_conv_stats_kernel(%arg0: i32, %arg1: i32, %arg2: memref<9x8x4xbf16, #tpu.memory_space<vmem>>, %arg3: memref<4x768xbf16, #tpu.memory_space<vmem>>, %arg4: memref<4x768xbf16, #tpu.memory_space<vmem>>, %arg5: memref<1x768xf32, #tpu.memory_space<vmem>>, %arg6: memref<8x768xbf16, #tpu.memory_space<vmem>>, %arg7: memref<1x8x1xf32, #tpu.memory_space<vmem>>, %arg8: memref<1x8x1xf32, #tpu.memory_space<vmem>>) attributes {dimension_semantics = [#tpu.dimension_semantics<parallel>, #tpu.dimension_semantics<arbitrary>], iteration_bounds = array<i64: 1, 1>, scalar_prefetch = 0 : i64, scratch_operands = 0 : i64, tpu.core_type = #tpu.core_type<tc>, window_params = [{pipeline_mode = #tpu.pipeline_mode<synchronous>, transform_indices = @transform_0, window_bounds = array<i64: 9, 8, 4>}, {transform_indices = @transform_1, window_bounds = array<i64: 4, 768>}, {transform_indices = @transform_2, window_bounds = array<i64: 4, 768>}, {transform_indices = @transform_3, window_bounds = array<i64: 1, 768>}, {transform_indices = @transform_4, window_bounds = array<i64: 8, 768>}, {transform_indices = @transform_5, window_bounds = array<i64: 1, 8, 1>}, {transform_indices = @transform_6, window_bounds = array<i64: 1, 8, 1>}]} {
    %c0_i32 = arith.constant 0 : i32
    %0 = arith.cmpi eq, %arg1, %c0_i32 : i32
    %1 = arith.extui %0 : i1 to i32
    %c0_i32_0 = arith.constant 0 : i32
    %2 = arith.cmpi ne, %1, %c0_i32_0 : i32
    scf.if %2 {
      %cst_50 = arith.constant 0.000000e+00 : f32
      %71 = vector.broadcast %cst_50 : f32 to vector<1x8x1xf32>
      %c0_51 = arith.constant 0 : index
      %c0_52 = arith.constant 0 : index
      %c0_53 = arith.constant 0 : index
      %72 = vector.load %arg7[%c0_51, %c0_52, %c0_53] : memref<1x8x1xf32, #tpu.memory_space<vmem>>, vector<1x8x1xf32>
      tpu.vector_store %arg7[%c0_51, %c0_52, %c0_53], %71 {strides = array<i32>} : memref<1x8x1xf32, #tpu.memory_space<vmem>>, vector<1x8x1xf32>,
      %cst_54 = arith.constant 0.000000e+00 : f32
      %73 = vector.broadcast %cst_54 : f32 to vector<1x8x1xf32>
      %c0_55 = arith.constant 0 : index
      %c0_56 = arith.constant 0 : index
      %c0_57 = arith.constant 0 : index
      %74 = vector.load %arg8[%c0_55, %c0_56, %c0_57] : memref<1x8x1xf32, #tpu.memory_space<vmem>>, vector<1x8x1xf32>
      tpu.vector_store %arg8[%c0_55, %c0_56, %c0_57], %73 {strides = array<i32>} : memref<1x8x1xf32, #tpu.memory_space<vmem>>, vector<1x8x1xf32>,
    } else {
    }
    %c0 = arith.constant 0 : index
    %c0_1 = arith.constant 0 : index
    %3 = vector.load %arg3[%c0, %c0_1] : memref<4x768xbf16, #tpu.memory_space<vmem>>, vector<4x768xbf16>
    %c0_2 = arith.constant 0 : index
    %c0_3 = arith.constant 0 : index
    %4 = vector.load %arg4[%c0_2, %c0_3] : memref<4x768xbf16, #tpu.memory_space<vmem>>, vector<4x768xbf16>
    %5 = tpu.concatenate %3, %4 in 1 : vector<4x768xbf16>, vector<4x768xbf16> -> vector<4x1536xbf16>
    %cst = arith.constant 0.000000e+00 : f32
    %6 = vector.broadcast %cst : f32 to vector<8x768xf32>
    %c0_4 = arith.constant 0 : index
    %c0_5 = arith.constant 0 : index
    %c0_6 = arith.constant 0 : index
    %7 = vector.load %arg2[%c0_4, %c0_5, %c0_6] : memref<9x8x4xbf16, #tpu.memory_space<vmem>>, vector<1x8x4xbf16>
    %8 = vector.shape_cast %7 : vector<1x8x4xbf16> to vector<8x4xbf16>
    %9 = vector.extract_strided_slice %5 {offsets = [0, 0], sizes = [4, 768], strides = [1, 1]} : vector<4x1536xbf16> to vector<4x768xbf16>
    %cst_7 = arith.constant dense<0.000000e+00> : vector<8x768xf32>
    %10 = tpu.matmul %8, %9, %cst_7 {dimension_numbers = #tpu.dot_dimension_numbers<[1], [0], [0], [1], [0, 0, 1, 1], [], []>} : vector<8x4xbf16>, vector<4x768xbf16>, vector<8x768xf32> -> vector<8x768xf32>
    %11 = arith.addf %6, %10 : vector<8x768xf32>
    %c1 = arith.constant 1 : index
    %c0_8 = arith.constant 0 : index
    %c0_9 = arith.constant 0 : index
    %12 = vector.load %arg2[%c1, %c0_8, %c0_9] : memref<9x8x4xbf16, #tpu.memory_space<vmem>>, vector<1x8x4xbf16>
    %13 = vector.shape_cast %12 : vector<1x8x4xbf16> to vector<8x4xbf16>
    %14 = vector.extract_strided_slice %5 {offsets = [0, 1], sizes = [4, 768], strides = [1, 1]} : vector<4x1536xbf16> to vector<4x768xbf16>
    %cst_10 = arith.constant dense<0.000000e+00> : vector<8x768xf32>
    %15 = tpu.matmul %13, %14, %cst_10 {dimension_numbers = #tpu.dot_dimension_numbers<[1], [0], [0], [1], [0, 0, 1, 1], [], []>} : vector<8x4xbf16>, vector<4x768xbf16>, vector<8x768xf32> -> vector<8x768xf32>
    %16 = arith.addf %11, %15 : vector<8x768xf32>
    %c2 = arith.constant 2 : index
    %c0_11 = arith.constant 0 : index
    %c0_12 = arith.constant 0 : index
    %17 = vector.load %arg2[%c2, %c0_11, %c0_12] : memref<9x8x4xbf16, #tpu.memory_space<vmem>>, vector<1x8x4xbf16>
    %18 = vector.shape_cast %17 : vector<1x8x4xbf16> to vector<8x4xbf16>
    %19 = vector.extract_strided_slice %5 {offsets = [0, 2], sizes = [4, 768], strides = [1, 1]} : vector<4x1536xbf16> to vector<4x768xbf16>
    %cst_13 = arith.constant dense<0.000000e+00> : vector<8x768xf32>
    %20 = tpu.matmul %18, %19, %cst_13 {dimension_numbers = #tpu.dot_dimension_numbers<[1], [0], [0], [1], [0, 0, 1, 1], [], []>} : vector<8x4xbf16>, vector<4x768xbf16>, vector<8x768xf32> -> vector<8x768xf32>
    %21 = arith.addf %16, %20 : vector<8x768xf32>
    %c3 = arith.constant 3 : index
    %c0_14 = arith.constant 0 : index
    %c0_15 = arith.constant 0 : index
    %22 = vector.load %arg2[%c3, %c0_14, %c0_15] : memref<9x8x4xbf16, #tpu.memory_space<vmem>>, vector<1x8x4xbf16>
    %23 = vector.shape_cast %22 : vector<1x8x4xbf16> to vector<8x4xbf16>
    %24 = vector.extract_strided_slice %5 {offsets = [0, 18], sizes = [4, 768], strides = [1, 1]} : vector<4x1536xbf16> to vector<4x768xbf16>
    %cst_16 = arith.constant dense<0.000000e+00> : vector<8x768xf32>
    %25 = tpu.matmul %23, %24, %cst_16 {dimension_numbers = #tpu.dot_dimension_numbers<[1], [0], [0], [1], [0, 0, 1, 1], [], []>} : vector<8x4xbf16>, vector<4x768xbf16>, vector<8x768xf32> -> vector<8x768xf32>
    %26 = arith.addf %21, %25 : vector<8x768xf32>
    %c4 = arith.constant 4 : index
    %c0_17 = arith.constant 0 : index
    %c0_18 = arith.constant 0 : index
    %27 = vector.load %arg2[%c4, %c0_17, %c0_18] : memref<9x8x4xbf16, #tpu.memory_space<vmem>>, vector<1x8x4xbf16>
    %28 = vector.shape_cast %27 : vector<1x8x4xbf16> to vector<8x4xbf16>
    %29 = vector.extract_strided_slice %5 {offsets = [0, 19], sizes = [4, 768], strides = [1, 1]} : vector<4x1536xbf16> to vector<4x768xbf16>
    %cst_19 = arith.constant dense<0.000000e+00> : vector<8x768xf32>
    %30 = tpu.matmul %28, %29, %cst_19 {dimension_numbers = #tpu.dot_dimension_numbers<[1], [0], [0], [1], [0, 0, 1, 1], [], []>} : vector<8x4xbf16>, vector<4x768xbf16>, vector<8x768xf32> -> vector<8x768xf32>
    %31 = arith.addf %26, %30 : vector<8x768xf32>
    %c5 = arith.constant 5 : index
    %c0_20 = arith.constant 0 : index
    %c0_21 = arith.constant 0 : index
    %32 = vector.load %arg2[%c5, %c0_20, %c0_21] : memref<9x8x4xbf16, #tpu.memory_space<vmem>>, vector<1x8x4xbf16>
    %33 = vector.shape_cast %32 : vector<1x8x4xbf16> to vector<8x4xbf16>
    %34 = vector.extract_strided_slice %5 {offsets = [0, 20], sizes = [4, 768], strides = [1, 1]} : vector<4x1536xbf16> to vector<4x768xbf16>
    %cst_22 = arith.constant dense<0.000000e+00> : vector<8x768xf32>
    %35 = tpu.matmul %33, %34, %cst_22 {dimension_numbers = #tpu.dot_dimension_numbers<[1], [0], [0], [1], [0, 0, 1, 1], [], []>} : vector<8x4xbf16>, vector<4x768xbf16>, vector<8x768xf32> -> vector<8x768xf32>
    %36 = arith.addf %31, %35 : vector<8x768xf32>
    %c6 = arith.constant 6 : index
    %c0_23 = arith.constant 0 : index
    %c0_24 = arith.constant 0 : index
    %37 = vector.load %arg2[%c6, %c0_23, %c0_24] : memref<9x8x4xbf16, #tpu.memory_space<vmem>>, vector<1x8x4xbf16>
    %38 = vector.shape_cast %37 : vector<1x8x4xbf16> to vector<8x4xbf16>
    %39 = vector.extract_strided_slice %5 {offsets = [0, 36], sizes = [4, 768], strides = [1, 1]} : vector<4x1536xbf16> to vector<4x768xbf16>
    %cst_25 = arith.constant dense<0.000000e+00> : vector<8x768xf32>
    %40 = tpu.matmul %38, %39, %cst_25 {dimension_numbers = #tpu.dot_dimension_numbers<[1], [0], [0], [1], [0, 0, 1, 1], [], []>} : vector<8x4xbf16>, vector<4x768xbf16>, vector<8x768xf32> -> vector<8x768xf32>
    %41 = arith.addf %36, %40 : vector<8x768xf32>
    %c7 = arith.constant 7 : index
    %c0_26 = arith.constant 0 : index
    %c0_27 = arith.constant 0 : index
    %42 = vector.load %arg2[%c7, %c0_26, %c0_27] : memref<9x8x4xbf16, #tpu.memory_space<vmem>>, vector<1x8x4xbf16>
    %43 = vector.shape_cast %42 : vector<1x8x4xbf16> to vector<8x4xbf16>
    %44 = vector.extract_strided_slice %5 {offsets = [0, 37], sizes = [4, 768], strides = [1, 1]} : vector<4x1536xbf16> to vector<4x768xbf16>
    %cst_28 = arith.constant dense<0.000000e+00> : vector<8x768xf32>
    %45 = tpu.matmul %43, %44, %cst_28 {dimension_numbers = #tpu.dot_dimension_numbers<[1], [0], [0], [1], [0, 0, 1, 1], [], []>} : vector<8x4xbf16>, vector<4x768xbf16>, vector<8x768xf32> -> vector<8x768xf32>
    %46 = arith.addf %41, %45 : vector<8x768xf32>
    %c8 = arith.constant 8 : index
    %c0_29 = arith.constant 0 : index
    %c0_30 = arith.constant 0 : index
    %47 = vector.load %arg2[%c8, %c0_29, %c0_30] : memref<9x8x4xbf16, #tpu.memory_space<vmem>>, vector<1x8x4xbf16>
    %48 = vector.shape_cast %47 : vector<1x8x4xbf16> to vector<8x4xbf16>
    %49 = vector.extract_strided_slice %5 {offsets = [0, 38], sizes = [4, 768], strides = [1, 1]} : vector<4x1536xbf16> to vector<4x768xbf16>
    %cst_31 = arith.constant dense<0.000000e+00> : vector<8x768xf32>
    %50 = tpu.matmul %48, %49, %cst_31 {dimension_numbers = #tpu.dot_dimension_numbers<[1], [0], [0], [1], [0, 0, 1, 1], [], []>} : vector<8x4xbf16>, vector<4x768xbf16>, vector<8x768xf32> -> vector<8x768xf32>
    %51 = arith.addf %46, %50 : vector<8x768xf32>
    %52 = arith.truncf %51 : vector<8x768xf32> to vector<8x768xbf16>
    %c0_32 = arith.constant 0 : index
    %c0_33 = arith.constant 0 : index
    %53 = vector.load %arg6[%c0_32, %c0_33] : memref<8x768xbf16, #tpu.memory_space<vmem>>, vector<8x768xbf16>
    tpu.vector_store %arg6[%c0_32, %c0_33], %52 {strides = array<i32>} : memref<8x768xbf16, #tpu.memory_space<vmem>>, vector<8x768xbf16>,
    %54 = arith.extf %52 : vector<8x768xbf16> to vector<8x768xf32>
    %c0_34 = arith.constant 0 : index
    %c0_35 = arith.constant 0 : index
    %55 = vector.load %arg5[%c0_34, %c0_35] : memref<1x768xf32, #tpu.memory_space<vmem>>, vector<1x768xf32>
    %56 = vector.broadcast %55 : vector<1x768xf32> to vector<8x768xf32>
    %57 = arith.mulf %54, %56 : vector<8x768xf32>
    %c0_36 = arith.constant 0 : index
    %c0_37 = arith.constant 0 : index
    %c0_38 = arith.constant 0 : index
    %58 = vector.load %arg7[%c0_36, %c0_37, %c0_38] : memref<1x8x1xf32, #tpu.memory_space<vmem>>, vector<1x8x1xf32>
    %cst_39 = arith.constant dense<0.000000e+00> : vector<8xf32>
    %59 = vector.multi_reduction <add>, %57, %cst_39 [1] : vector<8x768xf32> to vector<8xf32>
    %60 = vector.shape_cast %59 : vector<8xf32> to vector<8x1xf32>
    %61 = vector.shape_cast %60 : vector<8x1xf32> to vector<1x8x1xf32>
    %62 = arith.addf %58, %61 : vector<1x8x1xf32>
    %c0_40 = arith.constant 0 : index
    %c0_41 = arith.constant 0 : index
    %c0_42 = arith.constant 0 : index
    %63 = vector.load %arg7[%c0_40, %c0_41, %c0_42] : memref<1x8x1xf32, #tpu.memory_space<vmem>>, vector<1x8x1xf32>
    tpu.vector_store %arg7[%c0_40, %c0_41, %c0_42], %62 {strides = array<i32>} : memref<1x8x1xf32, #tpu.memory_space<vmem>>, vector<1x8x1xf32>,
    %c0_43 = arith.constant 0 : index
    %c0_44 = arith.constant 0 : index
    %c0_45 = arith.constant 0 : index
    %64 = vector.load %arg8[%c0_43, %c0_44, %c0_45] : memref<1x8x1xf32, #tpu.memory_space<vmem>>, vector<1x8x1xf32>
    %65 = arith.mulf %57, %54 : vector<8x768xf32>
    %cst_46 = arith.constant dense<0.000000e+00> : vector<8xf32>
    %66 = vector.multi_reduction <add>, %65, %cst_46 [1] : vector<8x768xf32> to vector<8xf32>
    %67 = vector.shape_cast %66 : vector<8xf32> to vector<8x1xf32>
    %68 = vector.shape_cast %67 : vector<8x1xf32> to vector<1x8x1xf32>
    %69 = arith.addf %64, %68 : vector<1x8x1xf32>
    %c0_47 = arith.constant 0 : index
    %c0_48 = arith.constant 0 : index
    %c0_49 = arith.constant 0 : index
    %70 = vector.load %arg8[%c0_47, %c0_48, %c0_49] : memref<1x8x1xf32, #tpu.memory_space<vmem>>, vector<1x8x1xf32>
    tpu.vector_store %arg8[%c0_47, %c0_48, %c0_49], %69 {strides = array<i32>} : memref<1x8x1xf32, #tpu.memory_space<vmem>>, vector<1x8x1xf32>,
    return
  }
  func.func @transform_0(%arg0: i32, %arg1: i32) -> (i32, i32, i32) {
    %c0_i32 = arith.constant 0 : i32
    %c0_i32_0 = arith.constant 0 : i32
    %c0_i32_1 = arith.constant 0 : i32
    %c0_i32_2 = arith.constant 0 : i32
    return %c0_i32, %c0_i32_0, %c0_i32_1 : i32, i32, i32
  }
  func.func @transform_1(%arg0: i32, %arg1: i32) -> (i32, i32) {
    %c1_i32 = arith.constant 1 : i32
    %0 = arith.muli %arg0, %c1_i32 : i32
    %1 = arith.addi %0, %arg1 : i32
    %c0_i32 = arith.constant 0 : i32
    %c0_i32_0 = arith.constant 0 : i32
    return %c0_i32, %1 : i32, i32
  }
  func.func @transform_2(%arg0: i32, %arg1: i32) -> (i32, i32) {
    %c1_i32 = arith.constant 1 : i32
    %0 = arith.muli %arg0, %c1_i32 : i32
    %1 = arith.addi %0, %arg1 : i32
    %c1_i32_0 = arith.constant 1 : i32
    %2 = arith.addi %1, %c1_i32_0 : i32
    %c0_i32 = arith.constant 0 : i32
    %c0_i32_1 = arith.constant 0 : i32
    return %c0_i32, %2 : i32, i32
  }
  func.func @transform_3(%arg0: i32, %arg1: i32) -> (i32, i32) {
    %c1_i32 = arith.constant 1 : i32
    %0 = arith.muli %arg0, %c1_i32 : i32
    %1 = arith.addi %0, %arg1 : i32
    %c0_i32 = arith.constant 0 : i32
    %c0_i32_0 = arith.constant 0 : i32
    return %c0_i32, %1 : i32, i32
  }
  func.func @transform_4(%arg0: i32, %arg1: i32) -> (i32, i32) {
    %c1_i32 = arith.constant 1 : i32
    %0 = arith.muli %arg0, %c1_i32 : i32
    %1 = arith.addi %0, %arg1 : i32
    %c0_i32 = arith.constant 0 : i32
    %c0_i32_0 = arith.constant 0 : i32
    return %c0_i32, %1 : i32, i32
  }
  func.func @transform_5(%arg0: i32, %arg1: i32) -> (i32, i32, i32) {
    %c0_i32 = arith.constant 0 : i32
    %c0_i32_0 = arith.constant 0 : i32
    %c0_i32_1 = arith.constant 0 : i32
    return %arg0, %c0_i32, %c0_i32_0 : i32, i32, i32
  }
  func.func @transform_6(%arg0: i32, %arg1: i32) -> (i32, i32, i32) {
    %c0_i32 = arith.constant 0 : i32
    %c0_i32_0 = arith.constant 0 : i32
    %c0_i32_1 = arith.constant 0 : i32
    return %arg0, %c0_i32, %c0_i32_0 : i32, i32, i32
  }
}

module attributes {stable_mosaic.version = 11 : i64} {
  func.func @_bn_silu_kernel(%arg0: i32, %arg1: memref<8x768xbf16, #tpu.memory_space<vmem>>, %arg2: memref<8x1xf32, #tpu.memory_space<vmem>>, %arg3: memref<8x1xf32, #tpu.memory_space<vmem>>, %arg4: memref<8x768xf32, #tpu.memory_space<vmem>>) attributes {dimension_semantics = [#tpu.dimension_semantics<parallel>], iteration_bounds = array<i64: 1>, scalar_prefetch = 0 : i64, scratch_operands = 0 : i64, tpu.core_type = #tpu.core_type<tc>, window_params = [{transform_indices = @transform_0, window_bounds = array<i64: 8, 768>}, {pipeline_mode = #tpu.pipeline_mode<synchronous>, transform_indices = @transform_1, window_bounds = array<i64: 8, 1>}, {pipeline_mode = #tpu.pipeline_mode<synchronous>, transform_indices = @transform_2, window_bounds = array<i64: 8, 1>}, {transform_indices = @transform_3, window_bounds = array<i64: 8, 768>}]} {
    %c0 = arith.constant 0 : index
    %c0_0 = arith.constant 0 : index
    %0 = vector.load %arg1[%c0, %c0_0] : memref<8x768xbf16, #tpu.memory_space<vmem>>, vector<8x768xbf16>
    %1 = arith.extf %0 : vector<8x768xbf16> to vector<8x768xf32>
    %c0_1 = arith.constant 0 : index
    %c0_2 = arith.constant 0 : index
    %2 = vector.load %arg2[%c0_1, %c0_2] : memref<8x1xf32, #tpu.memory_space<vmem>>, vector<8x1xf32>
    %3 = vector.broadcast %2 : vector<8x1xf32> to vector<8x768xf32>
    %4 = arith.mulf %1, %3 : vector<8x768xf32>
    %c0_3 = arith.constant 0 : index
    %c0_4 = arith.constant 0 : index
    %5 = vector.load %arg3[%c0_3, %c0_4] : memref<8x1xf32, #tpu.memory_space<vmem>>, vector<8x1xf32>
    %6 = vector.broadcast %5 : vector<8x1xf32> to vector<8x768xf32>
    %7 = arith.addf %4, %6 : vector<8x768xf32>
    %cst = arith.constant 5.000000e-01 : f32
    %8 = vector.broadcast %cst : f32 to vector<8x768xf32>
    %9 = arith.mulf %8, %7 : vector<8x768xf32>
    %10 = math.tanh %9 : vector<8x768xf32>
    %11 = arith.mulf %9, %10 : vector<8x768xf32>
    %12 = arith.addf %9, %11 : vector<8x768xf32>
    %c0_5 = arith.constant 0 : index
    %c0_6 = arith.constant 0 : index
    %13 = vector.load %arg4[%c0_5, %c0_6] : memref<8x768xf32, #tpu.memory_space<vmem>>, vector<8x768xf32>
    tpu.vector_store %arg4[%c0_5, %c0_6], %12 {strides = array<i32>} : memref<8x768xf32, #tpu.memory_space<vmem>>, vector<8x768xf32>,
    return
  }
  func.func @transform_0(%arg0: i32) -> (i32, i32) {
    %c0_i32 = arith.constant 0 : i32
    %c0_i32_0 = arith.constant 0 : i32
    return %c0_i32, %arg0 : i32, i32
  }
  func.func @transform_1(%arg0: i32) -> (i32, i32) {
    %c0_i32 = arith.constant 0 : i32
    %c0_i32_0 = arith.constant 0 : i32
    %c0_i32_1 = arith.constant 0 : i32
    return %c0_i32, %c0_i32_0 : i32, i32
  }
  func.func @transform_2(%arg0: i32) -> (i32, i32) {
    %c0_i32 = arith.constant 0 : i32
    %c0_i32_0 = arith.constant 0 : i32
    %c0_i32_1 = arith.constant 0 : i32
    return %c0_i32, %c0_i32_0 : i32, i32
  }
  func.func @transform_3(%arg0: i32) -> (i32, i32) {
    %c0_i32 = arith.constant 0 : i32
    %c0_i32_0 = arith.constant 0 : i32
    return %c0_i32, %arg0 : i32, i32
  }
}

</mosaic_0001>

<llo_original>
// kernel: conv_bn_silu.3
$region0: #{conv_bn_silu.3}
  #allocation0 [shape = 'u32[]', space=smem, size = 0x4, offset = 0x4, fixed_abs, tag = 'smem constant byte address 0x4 - core index']
  #allocation1 [shape = 'u32[144,128]{1,0:T(1,128)}', space=vmem, size = 0x12000, scoped, tag = 'internal scratch']
  %s0 = inlined_call_operand.vmem [shape: bf16[8,768], index: 0, kind: input, shape index: {}]
  %s1 = inlined_call_operand.vmem [shape: f32[8,1], index: 1, kind: input, shape index: {}]
  %s2 = inlined_call_operand.vmem [shape: f32[8,1], index: 2, kind: input, shape index: {}]
  %s3 = inlined_call_operand.vmem [shape: f32[8,768], index: 3, kind: output, shape index: {}]
  %s4 = sld [smem:[#allocation0]]
  $region22: #{conv_bn_silu.3} parent=0
    _
  %s6 = ssub.s32 1, %s4
  %s7 = scalar_select 0, %s6, %s4
  // Predicated region
  $region2: #{conv_bn_silu.3} parent=0 // pred_check
    _
  $region3: #{conv_bn_silu.3} parent=0 // pred_check_branch
    %9 = sbr.rel (0) target = $region5
  $region4: #{conv_bn_silu.3} parent=0 // pred_region
    _
  $region5: #{conv_bn_silu.3} parent=0 // pred_fallthru
    _
  // Predicated region
  $region6: #{conv_bn_silu.3} parent=0 // pred_check
    _
  $region7: #{conv_bn_silu.3} parent=0 // pred_check_branch
    %11 = sbr.rel (0) target = $region9
  $region8: #{conv_bn_silu.3} parent=0 // pred_region
    _
  $region9: #{conv_bn_silu.3} parent=0 // pred_fallthru
    _
  // Predicated region
  $region10: #{conv_bn_silu.3} parent=0 // pred_check
    _
  $region11: #{conv_bn_silu.3} parent=0 // pred_check_branch
    %13 = sbr.rel (0) target = $region13
  $region12: #{conv_bn_silu.3} parent=0 // pred_region
    _
  $region13: #{conv_bn_silu.3} parent=0 // pred_fallthru
    _
  %v14 = vld [vmem:[%s0] sm:$0xff]
  %v15 = vld [vmem:[%s0 + $0x8] sm:$0xff]
  %v16 = vld [vmem:[%s0 + $0x10] sm:$0xff]
  %v17 = vunpack.c.l.bf16 %v14
  %v18 = vunpack.c.h.bf16 %v14
  %v19 = vunpack.c.l.bf16 %v15
  %v20 = vunpack.c.h.bf16 %v15
  %v21 = vunpack.c.l.bf16 %v16
  %v22 = vunpack.c.h.bf16 %v16
  %v23 = vld [vmem:[%s1] sm:$0xff]
  %25 = vset.pattern.permute.xlu0 0
  %26 = vperm.xlu0 %25, %v23
  %v27 = vpop.permute.xlu0 %26
  %v29 = vmul.f32 %v17, %v27
  %v30 = vmul.f32 %v18, %v27
  %v31 = vmul.f32 %v19, %v27
  %v32 = vmul.f32 %v20, %v27
  %v33 = vmul.f32 %v21, %v27
  %v34 = vmul.f32 %v22, %v27
  %v35 = vld [vmem:[%s2] sm:$0xff]
  %37 = vset.pattern.permute.xlu0 0
  %38 = vperm.xlu0 %37, %v35
  %v39 = vpop.permute.xlu0 %38
  %v41 = vadd.f32 %v29, %v39
  %v42 = vadd.f32 %v30, %v39
  %v43 = vadd.f32 %v31, %v39
  %v44 = vadd.f32 %v32, %v39
  %v45 = vadd.f32 %v33, %v39
  %v46 = vadd.f32 %v34, %v39
  %v47 = vmul.f32 %v41, 0.5
  %v48 = vmul.f32 %v42, 0.5
  %v49 = vmul.f32 %v43, 0.5
  %v50 = vmul.f32 %v44, 0.5
  %v51 = vmul.f32 %v45, 0.5
  %v52 = vmul.f32 %v46, 0.5
  %v53 = vtanh.pop %v47
  %v54 = vtanh.pop %v48
  %v55 = vtanh.pop %v49
  %v56 = vtanh.pop %v50
  %v57 = vtanh.pop %v51
  %v58 = vtanh.pop %v52
  %v59 = vmul.f32 %v47, %v53
  %v60 = vmul.f32 %v48, %v54
  %v61 = vmul.f32 %v49, %v55
  %v62 = vmul.f32 %v50, %v56
  %v63 = vmul.f32 %v51, %v57
  %v64 = vmul.f32 %v52, %v58
  %v65 = vadd.f32 %v47, %v59
  %v66 = vadd.f32 %v48, %v60
  %v67 = vadd.f32 %v49, %v61
  %v68 = vadd.f32 %v50, %v62
  %v69 = vadd.f32 %v51, %v63
  %v70 = vadd.f32 %v52, %v64
  %71 = vst [vmem:[%s3] sm:$0xff] %v65
  %72 = vst [vmem:[%s3 + $0x8] sm:$0xff] %v66
  %73 = vst [vmem:[%s3 + $0x10] sm:$0xff] %v67
  %74 = vst [vmem:[%s3 + $0x18] sm:$0xff] %v68
  %75 = vst [vmem:[%s3 + $0x20] sm:$0xff] %v69
  %76 = vst [vmem:[%s3 + $0x28] sm:$0xff] %v70
  // Predicated region
  $region14: #{conv_bn_silu.3} parent=0 // pred_check
    _
  $region15: #{conv_bn_silu.3} parent=0 // pred_check_branch
    %78 = sbr.rel (0) target = $region17
  $region16: #{conv_bn_silu.3} parent=0 // pred_region
    _
  $region17: #{conv_bn_silu.3} parent=0 // pred_fallthru
    _
  // Predicated region
  $region18: #{conv_bn_silu.3} parent=0 // pred_check
    _
  $region19: #{conv_bn_silu.3} parent=0 // pred_check_branch
    %80 = sbr.rel (0) target = $region21
  $region20: #{conv_bn_silu.3} parent=0 // pred_region
    _
  $region21: #{conv_bn_silu.3} parent=0 // pred_fallthru
    _

// kernel: conv_bn_silu.2
$region0: #{conv_bn_silu.2}
  #allocation0 [shape = 'u32[]', space=smem, size = 0x4, offset = 0x4, fixed_abs, tag = 'smem constant byte address 0x4 - core index']
  #allocation1 [shape = 'u32[144,128]{1,0:T(1,128)}', space=vmem, size = 0x12000, scoped, tag = 'internal scratch']
  %s0 = inlined_call_operand.vmem [shape: bf16[9,8,4], index: 0, kind: input, shape index: {}]
  %s1 = inlined_call_operand.vmem [shape: bf16[4,1536], index: 1, kind: input, shape index: {}, may-alias: {1,2}]
  %s2 = inlined_call_operand.vmem [shape: bf16[4,1536], index: 2, kind: input, shape index: {}, may-alias: {1,2}]
  %s3 = inlined_call_operand.vmem [shape: f32[1,768], index: 3, kind: input, shape index: {}]
  %s4 = inlined_call_operand.vmem [shape: bf16[8,768], index: 4, kind: output, shape index: {0}]
  %s5 = inlined_call_operand.vmem [shape: f32[1,8,1], index: 5, kind: output, shape index: {1}]
  %s6 = inlined_call_operand.vmem [shape: f32[1,8,1], index: 6, kind: output, shape index: {2}]
  %7 = xla_tuple %s4, %s5, %s6
  %s8 = sld [smem:[#allocation0]]
  $region46: #{conv_bn_silu.2} parent=0
    _
  %s10 = ssub.s32 1, %s8
  %s11 = scalar_select 0, %s10, %s8
  // Predicated region
  $region2: #{conv_bn_silu.2} parent=0 // pred_check
    _
  $region3: #{conv_bn_silu.2} parent=0 // pred_check_branch
    %13 = sbr.rel (0) target = $region5
  $region4: #{conv_bn_silu.2} parent=0 // pred_region
    _
  $region5: #{conv_bn_silu.2} parent=0 // pred_fallthru
    _
  // Predicated region
  $region6: #{conv_bn_silu.2} parent=0 // pred_check
    _
  $region7: #{conv_bn_silu.2} parent=0 // pred_check_branch
    %15 = sbr.rel (0) target = $region9
  $region8: #{conv_bn_silu.2} parent=0 // pred_region
    %s16 = sadd.s32 0, 0
    %s17 = smul.u32 6, %s16
    %p18 = scmp.lt.s32.totalorder %s17, 11
    %s19 = scalar_select %p18, %s17, 11
    %s20 = smul.addr %s19, 2
    %s21 = scalar_lea.vmem %s1, %s20
    %s22 = sadd.s32 0, 0
    %s23 = smul.u32 6, %s22
  $region9: #{conv_bn_silu.2} parent=0 // pred_fallthru
    _
  // Predicated region
  $region10: #{conv_bn_silu.2} parent=0 // pred_check
    _
  $region11: #{conv_bn_silu.2} parent=0 // pred_check_branch
    %25 = sbr.rel (0) target = $region13
  $region12: #{conv_bn_silu.2} parent=0 // pred_region
    %s26 = sadd.s32 0, 0
    %s27 = sadd.s32 %s26, 1
    %s28 = smul.u32 6, %s27
    %p29 = scmp.lt.s32.totalorder %s28, 11
    %s30 = scalar_select %p29, %s28, 11
    %s31 = smul.addr %s30, 2
    %s32 = scalar_lea.vmem %s2, %s31
    %s33 = sadd.s32 0, 0
    %s34 = sadd.s32 %s33, 1
    %s35 = smul.u32 6, %s34
  $region13: #{conv_bn_silu.2} parent=0 // pred_fallthru
    _
  // Predicated region
  $region14: #{conv_bn_silu.2} parent=0 // pred_check
    _
  $region15: #{conv_bn_silu.2} parent=0 // pred_check_branch
    %37 = sbr.rel (0) target = $region17
  $region16: #{conv_bn_silu.2} parent=0 // pred_region
    %s38 = sadd.s32 0, 0
    %s39 = smul.u32 6, %s38
    %p40 = scmp.lt.s32.totalorder %s39, 5
    %s41 = scalar_select %p40, %s39, 5
    %s42 = scalar_lea.vmem %s3, %s41
    %s43 = sadd.s32 0, 0
    %s44 = smul.u32 6, %s43
  $region17: #{conv_bn_silu.2} parent=0 // pred_fallthru
    _
  %s45 = sadd.s32 0, 0
  %s46 = smul.u32 6, %s45
  %p47 = scmp.lt.s32.totalorder %s46, 11
  %s48 = scalar_select %p47, %s46, 11
  %s49 = smul.addr %s48, 2
  %s50 = scalar_lea.vmem %s1, %s49
  %s51 = sadd.s32 0, 0
  %s52 = sadd.s32 %s51, 1
  %s53 = smul.u32 6, %s52
  %p54 = scmp.lt.s32.totalorder %s53, 11
  %s55 = scalar_select %p54, %s53, 11
  %s56 = smul.addr %s55, 2
  %s57 = scalar_lea.vmem %s2, %s56
  %s58 = sadd.s32 0, 0
  %s59 = smul.u32 6, %s58
  %p60 = scmp.lt.s32.totalorder %s59, 5
  %s61 = scalar_select %p60, %s59, 5
  %s62 = scalar_lea.vmem %s3, %s61
  %s63 = sadd.s32 0, 0
  %s64 = smul.u32 6, %s63
  %p65 = scmp.lt.s32.totalorder %s64, 5
  %s66 = scalar_select %p65, %s64, 5
  %s67 = smul.addr %s66, 4
  %s68 = scalar_lea.vmem %s4, %s67
  %s69 = sadd.s32 0, 0
  %s70 = smul.u32 6, %s69
  %p71 = scmp.lt.s32.totalorder %s70, 11
  %s72 = scalar_select %p71, %s70, 11
  %s73 = smul.addr %s72, 2
  %s74 = scalar_lea.vmem %s1, %s73
  %s75 = sadd.s32 0, 0
  %s76 = smul.u32 6, %s75
  %s77 = sadd.s32 0, 0
  %s78 = sadd.s32 %s77, 1
  %s79 = smul.u32 6, %s78
  %p80 = scmp.lt.s32.totalorder %s79, 11
  %s81 = scalar_select %p80, %s79, 11
  %s82 = smul.addr %s81, 2
  %s83 = scalar_lea.vmem %s2, %s82
  %s84 = sadd.s32 0, 0
  %s85 = sadd.s32 %s84, 1
  %s86 = smul.u32 6, %s85
  %s87 = sadd.s32 0, 0
  %s88 = smul.u32 6, %s87
  %p89 = scmp.lt.s32.totalorder %s88, 5
  %s90 = scalar_select %p89, %s88, 5
  %s91 = scalar_lea.vmem %s3, %s90
  %s92 = sadd.s32 0, 0
  %s93 = smul.u32 6, %s92
  %s94 = sadd.s32 0, 0
  %s95 = smul.u32 6, %s94
  %p96 = scmp.lt.s32.totalorder %s95, 5
  %s97 = scalar_select %p96, %s95, 5
  %s98 = smul.addr %s97, 4
  %s99 = scalar_lea.vmem %s4, %s98
  %s100 = sadd.s32 0, 0
  %s101 = smul.u32 6, %s100
  %p103 = scmp.eq.s32.totalorder 0, 0
  // Predicated region
  $region18: #{conv_bn_silu.2} parent=0 // pred_check
    %p104 = pneg %p103
  $region19: #{conv_bn_silu.2} parent=0 // pred_check_branch
    %106 = sbr.rel (%p104) target = $region21
  $region20: #{conv_bn_silu.2} parent=0 // pred_region
    %vm107 = vcmask 7168
    %108 = vst.msk [vmem:[%s5] sm:$0xff] %vm107, 0.0
    %109 = vst.msk [vmem:[%s6] sm:$0xff] %vm107, 0.0
  $region21: #{conv_bn_silu.2} parent=0 // pred_fallthru
    _
  %v110 = vld [vmem:[%s74] sm:$0xff]
  %v111 = vld [vmem:[%s74 + $0x8] sm:$0xf]
  %v112 = vld [vmem:[%s83] sm:$0xff]
  %v115 = vcombine.high %v110, %v110
  %v117 = vunpack.c.l.s4 1983009808
  %v118 = vunpack.c.0.s8 %v117
  %v119 = vlaneseq
  %v120 = vshrl.u32 %v119, 7
  %v121 = vsub.s32 %v118, %v120
  %v122 = vrot.slane %v110, %v121
  %v124 = vunpack.c.l.s4 1983009808
  %v125 = vunpack.c.0.s8 %v124
  %v126 = vlaneseq
  %v127 = vshrl.u32 %v126, 7
  %v128 = vsub.s32 %v125, %v127
  %v129 = vrot.slane %v115, %v128
  %v130 = vcombine.high %v122, %v122
  %v131 = vcombine.high %v129, %v129
  %v133 = vunpack.c.l.s4 1983009808
  %v134 = vunpack.c.0.s8 %v133
  %v135 = vlaneseq
  %v136 = vshrl.u32 %v135, 7
  %v137 = vsub.s32 %v134, %v136
  %v138 = vrot.slane %v111, %v137
  %v139 = vcombine.high %v138, %v138
  %v142 = vunpack.c.l.s4 1983009808
  %v143 = vunpack.c.0.s8 %v142
  %v144 = vlaneseq
  %v145 = vshrl.u32 %v144, 7
  %v146 = vsub.s32 %v143, %v145
  %v147 = vrot.slane %v112, %v146
  %v148 = vld [vmem:[%s0] sm:$0xf]
  %s149 = scalar_lea.vmem %s0, 4
  %v150 = vld [vmem:[%s149] sm:$0xf]
  %151 = vrot.lane.b32.xlu0 %v122, 127
  %v152 = vpop.permute.xlu0 %151
  %153 = vrot.lane.b32.xlu0 %v130, 127
  %v154 = vpop.permute.xlu0 %153
  %155 = vrot.lane.b32.xlu0 %v129, 127
  %v156 = vpop.permute.xlu0 %155
  %157 = vrot.lane.b32.xlu0 %v131, 127
  %v158 = vpop.permute.xlu0 %157
  %159 = vrot.lane.b32.xlu0 %v138, 127
  %v160 = vpop.permute.xlu0 %159
  %161 = vrot.lane.b32.xlu0 %v139, 127
  %v162 = vpop.permute.xlu0 %161
  %163 = vrot.lane.b32.xlu0 %v147, 127
  %v164 = vpop.permute.xlu0 %163
  %vm165 = vcmask 1039360
  %v166 = vsel %vm165, %v152, %v154
  %v167 = vsel %vm165, %v154, %v156
  %v168 = vsel %vm165, %v156, %v158
  %v169 = vsel %vm165, %v158, %v160
  %v170 = vsel %vm165, %v160, %v162
  %v171 = vsel %vm165, %v162, %v164
  %vm172 = vcmask 31744
  %v174 = vsel %vm172, %v150, 0
  %vm176 = vcmask 1041408
  %v178 = vsel %vm176, %v166, 0
  %v181 = vsel %vm176, %v167, 0
  %v184 = vsel %vm176, %v168, 0
  %v187 = vsel %vm176, %v169, 0
  %v190 = vsel %vm176, %v170, 0
  %v193 = vsel %vm176, %v171, 0
  %195 = vmatprep.subr.bf16.mxu0 0
  %196 = vmatpush1.bf16.msra.mxu0 0
  %197 = vmatprep.subr.bf16.mxu0 0
  %198 = vmatpush1.bf16.msra.mxu0 0
  %199 = vmatprep.subr.bf16.mxu0 0
  %200 = vmatpush1.bf16.msra.mxu0 0
  %201 = vmatprep.subr.bf16.mxu0 0
  %202 = vmatpush1.bf16.msra.mxu0 0
  %203 = vmatprep.subr.bf16.mxu0 0
  %204 = vmatpush1.bf16.msra.mxu0 0
  %205 = vmatprep.subr.bf16.mxu0 0
  %206 = vmatpush1.bf16.msra.mxu0 0
  %207 = vmatprep.subr.bf16.mxu0 0
  %208 = vmatpush1.bf16.msra.mxu0 0
  %209 = vmatprep.subr.bf16.mxu0 %v181
  %210 = vmatpush1.bf16.msra.mxu0 %v178
  %211 = vmatprep.subr.bf16.mxu0 0
  %212 = vmatpush2.bf16.msra.mxu0 0
  %213 = vmatprep.subr.bf16.mxu0 0
  %214 = vmatpush2.bf16.msra.mxu0 0
  %215 = vmatprep.subr.bf16.mxu0 0
  %216 = vmatpush2.bf16.msra.mxu0 0
  %217 = vmatprep.subr.bf16.mxu0 0
  %218 = vmatpush2.bf16.msra.mxu0 0
  %219 = vmatprep.subr.bf16.mxu0 0
  %220 = vmatpush2.bf16.msra.mxu0 0
  %221 = vmatprep.subr.bf16.mxu0 0
  %222 = vmatpush2.bf16.msra.mxu0 0
  %223 = vmatprep.subr.bf16.mxu0 0
  %224 = vmatpush2.bf16.msra.mxu0 0
  %225 = vmatprep.subr.bf16.mxu0 0
  %226 = vmatpush2.bf16.msra.mxu0 0
  %227 = vmatprep.mubr.bf16.mxu0 0
  %228 = vmatmul.mubr.bf16.gmra.mxu0 %v174
  %v229 = vpop.f32.mrf.mxu0
  %v230 = vadd.f32 0.0, %v229
  %v231 = vpop.f32.mrf.mxu0
  %v232 = vadd.f32 0.0, %v231
  %v233 = vpop.f32.mrf.mxu0
  %v234 = vpop.f32.mrf.mxu0
  %235 = vdwg.mxu0
  %236 = vmatprep.subr.bf16.mxu0 0
  %237 = vmatpush1.bf16.msra.mxu0 0
  %238 = vmatprep.subr.bf16.mxu0 0
  %239 = vmatpush1.bf16.msra.mxu0 0
  %240 = vmatprep.subr.bf16.mxu0 0
  %241 = vmatpush1.bf16.msra.mxu0 0
  %242 = vmatprep.subr.bf16.mxu0 0
  %243 = vmatpush1.bf16.msra.mxu0 0
  %244 = vmatprep.subr.bf16.mxu0 0
  %245 = vmatpush1.bf16.msra.mxu0 0
  %246 = vmatprep.subr.bf16.mxu0 0
  %247 = vmatpush1.bf16.msra.mxu0 0
  %248 = vmatprep.subr.bf16.mxu0 0
  %249 = vmatpush1.bf16.msra.mxu0 0
  %250 = vmatprep.subr.bf16.mxu0 %v187
  %251 = vmatpush1.bf16.msra.mxu0 %v184
  %252 = vmatprep.subr.bf16.mxu0 0
  %253 = vmatpush2.bf16.msra.mxu0 0
  %254 = vmatprep.subr.bf16.mxu0 0
  %255 = vmatpush2.bf16.msra.mxu0 0
  %256 = vmatprep.subr.bf16.mxu0 0
  %257 = vmatpush2.bf16.msra.mxu0 0
  %258 = vmatprep.subr.bf16.mxu0 0
  %259 = vmatpush2.bf16.msra.mxu0 0
  %260 = vmatprep.subr.bf16.mxu0 0
  %261 = vmatpush2.bf16.msra.mxu0 0
  %262 = vmatprep.subr.bf16.mxu0 0
  %263 = vmatpush2.bf16.msra.mxu0 0
  %264 = vmatprep.subr.bf16.mxu0 0
  %265 = vmatpush2.bf16.msra.mxu0 0
  %266 = vmatprep.subr.bf16.mxu0 0
  %267 = vmatpush2.bf16.msra.mxu0 0
  %268 = vmatprep.mubr.bf16.mxu0 0
  %269 = vmatmul.mubr.bf16.gmra.mxu0 %v174
  %v270 = vpop.f32.mrf.mxu0
  %v271 = vadd.f32 0.0, %v270
  %v272 = vpop.f32.mrf.mxu0
  %v273 = vadd.f32 0.0, %v272
  %v274 = vpop.f32.mrf.mxu0
  %v275 = vpop.f32.mrf.mxu0
  %276 = vdwg.mxu0
  %277 = vmatprep.subr.bf16.mxu0 0
  %278 = vmatpush1.bf16.msra.mxu0 0
  %279 = vmatprep.subr.bf16.mxu0 0
  %280 = vmatpush1.bf16.msra.mxu0 0
  %281 = vmatprep.subr.bf16.mxu0 0
  %282 = vmatpush1.bf16.msra.mxu0 0
  %283 = vmatprep.subr.bf16.mxu0 0
  %284 = vmatpush1.bf16.msra.mxu0 0
  %285 = vmatprep.subr.bf16.mxu0 0
  %286 = vmatpush1.bf16.msra.mxu0 0
  %287 = vmatprep.subr.bf16.mxu0 0
  %288 = vmatpush1.bf16.msra.mxu0 0
  %289 = vmatprep.subr.bf16.mxu0 0
  %290 = vmatpush1.bf16.msra.mxu0 0
  %291 = vmatprep.subr.bf16.mxu0 %v193
  %292 = vmatpush1.bf16.msra.mxu0 %v190
  %293 = vmatprep.subr.bf16.mxu0 0
  %294 = vmatpush2.bf16.msra.mxu0 0
  %295 = vmatprep.subr.bf16.mxu0 0
  %296 = vmatpush2.bf16.msra.mxu0 0
  %297 = vmatprep.subr.bf16.mxu0 0
  %298 = vmatpush2.bf16.msra.mxu0 0
  %299 = vmatprep.subr.bf16.mxu0 0
  %300 = vmatpush2.bf16.msra.mxu0 0
  %301 = vmatprep.subr.bf16.mxu0 0
  %302 = vmatpush2.bf16.msra.mxu0 0
  %303 = vmatprep.subr.bf16.mxu0 0
  %304 = vmatpush2.bf16.msra.mxu0 0
  %305 = vmatprep.subr.bf16.mxu0 0
  %306 = vmatpush2.bf16.msra.mxu0 0
  %307 = vmatprep.subr.bf16.mxu0 0
  %308 = vmatpush2.bf16.msra.mxu0 0
  %309 = vmatprep.mubr.bf16.mxu0 0
  %310 = vmatmul.mubr.bf16.gmra.mxu0 %v174
  %v311 = vpop.f32.mrf.mxu0
  %v312 = vadd.f32 0.0, %v311
  %v313 = vpop.f32.mrf.mxu0
  %v314 = vadd.f32 0.0, %v313
  %v315 = vpop.f32.mrf.mxu0
  %v316 = vpop.f32.mrf.mxu0
  %317 = vdwg.mxu0
  %v319 = vsel %vm172, %v148, 0
  %v322 = vsel %vm176, %v122, 0
  %v325 = vsel %vm176, %v130, 0
  %v328 = vsel %vm176, %v129, 0
  %v331 = vsel %vm176, %v131, 0
  %v334 = vsel %vm176, %v138, 0
  %v337 = vsel %vm176, %v139, 0
  %339 = vmatprep.subr.bf16.mxu0 0
  %340 = vmatpush1.bf16.msra.mxu0 0
  %341 = vmatprep.subr.bf16.mxu0 0
  %342 = vmatpush1.bf16.msra.mxu0 0
  %343 = vmatprep.subr.bf16.mxu0 0
  %344 = vmatpush1.bf16.msra.mxu0 0
  %345 = vmatprep.subr.bf16.mxu0 0
  %346 = vmatpush1.bf16.msra.mxu0 0
  %347 = vmatprep.subr.bf16.mxu0 0
  %348 = vmatpush1.bf16.msra.mxu0 0
  %349 = vmatprep.subr.bf16.mxu0 0
  %350 = vmatpush1.bf16.msra.mxu0 0
  %351 = vmatprep.subr.bf16.mxu0 0
  %352 = vmatpush1.bf16.msra.mxu0 0
  %353 = vmatprep.subr.bf16.mxu0 %v325
  %354 = vmatpush1.bf16.msra.mxu0 %v322
  %355 = vmatprep.subr.bf16.mxu0 0
  %356 = vmatpush2.bf16.msra.mxu0 0
  %357 = vmatprep.subr.bf16.mxu0 0
  %358 = vmatpush2.bf16.msra.mxu0 0
  %359 = vmatprep.subr.bf16.mxu0 0
  %360 = vmatpush2.bf16.msra.mxu0 0
  %361 = vmatprep.subr.bf16.mxu0 0
  %362 = vmatpush2.bf16.msra.mxu0 0
  %363 = vmatprep.subr.bf16.mxu0 0
  %364 = vmatpush2.bf16.msra.mxu0 0
  %365 = vmatprep.subr.bf16.mxu0 0
  %366 = vmatpush2.bf16.msra.mxu0 0
  %367 = vmatprep.subr.bf16.mxu0 0
  %368 = vmatpush2.bf16.msra.mxu0 0
  %369 = vmatprep.subr.bf16.mxu0 0
  %370 = vmatpush2.bf16.msra.mxu0 0
  %371 = vmatprep.mubr.bf16.mxu0 0
  %372 = vmatmul.mubr.bf16.gmra.mxu0 %v319
  %v373 = vpop.f32.mrf.mxu0
  %v374 = vadd.f32 %v230, %v373
  %v375 = vpop.f32.mrf.mxu0
  %v376 = vadd.f32 %v232, %v375
  %v377 = vpop.f32.mrf.mxu0
  %v378 = vpop.f32.mrf.mxu0
  %379 = vdwg.mxu0
  %380 = vmatprep.subr.bf16.mxu0 0
  %381 = vmatpush1.bf16.msra.mxu0 0
  %382 = vmatprep.subr.bf16.mxu0 0
  %383 = vmatpush1.bf16.msra.mxu0 0
  %384 = vmatprep.subr.bf16.mxu0 0
  %385 = vmatpush1.bf16.msra.mxu0 0
  %386 = vmatprep.subr.bf16.mxu0 0
  %387 = vmatpush1.bf16.msra.mxu0 0
  %388 = vmatprep.subr.bf16.mxu0 0
  %389 = vmatpush1.bf16.msra.mxu0 0
  %390 = vmatprep.subr.bf16.mxu0 0
  %391 = vmatpush1.bf16.msra.mxu0 0
  %392 = vmatprep.subr.bf16.mxu0 0
  %393 = vmatpush1.bf16.msra.mxu0 0
  %394 = vmatprep.subr.bf16.mxu0 %v331
  %395 = vmatpush1.bf16.msra.mxu0 %v328
  %396 = vmatprep.subr.bf16.mxu0 0
  %397 = vmatpush2.bf16.msra.mxu0 0
  %398 = vmatprep.subr.bf16.mxu0 0
  %399 = vmatpush2.bf16.msra.mxu0 0
  %400 = vmatprep.subr.bf16.mxu0 0
  %401 = vmatpush2.bf16.msra.mxu0 0
  %402 = vmatprep.subr.bf16.mxu0 0
  %403 = vmatpush2.bf16.msra.mxu0 0
  %404 = vmatprep.subr.bf16.mxu0 0
  %405 = vmatpush2.bf16.msra.mxu0 0
  %406 = vmatprep.subr.bf16.mxu0 0
  %407 = vmatpush2.bf16.msra.mxu0 0
  %408 = vmatprep.subr.bf16.mxu0 0
  %409 = vmatpush2.bf16.msra.mxu0 0
  %410 = vmatprep.subr.bf16.mxu0 0
  %411 = vmatpush2.bf16.msra.mxu0 0
  %412 = vmatprep.mubr.bf16.mxu0 0
  %413 = vmatmul.mubr.bf16.gmra.mxu0 %v319
  %v414 = vpop.f32.mrf.mxu0
  %v415 = vadd.f32 %v271, %v414
  %v416 = vpop.f32.mrf.mxu0
  %v417 = vadd.f32 %v273, %v416
  %v418 = vpop.f32.mrf.mxu0
  %v419 = vpop.f32.mrf.mxu0
  %420 = vdwg.mxu0
  %421 = vmatprep.subr.bf16.mxu0 0
  %422 = vmatpush1.bf16.msra.mxu0 0
  %423 = vmatprep.subr.bf16.mxu0 0
  %424 = vmatpush1.bf16.msra.mxu0 0
  %425 = vmatprep.subr.bf16.mxu0 0
  %426 = vmatpush1.bf16.msra.mxu0 0
  %427 = vmatprep.subr.bf16.mxu0 0
  %428 = vmatpush1.bf16.msra.mxu0 0
  %429 = vmatprep.subr.bf16.mxu0 0
  %430 = vmatpush1.bf16.msra.mxu0 0
  %431 = vmatprep.subr.bf16.mxu0 0
  %432 = vmatpush1.bf16.msra.mxu0 0
  %433 = vmatprep.subr.bf16.mxu0 0
  %434 = vmatpush1.bf16.msra.mxu0 0
  %435 = vmatprep.subr.bf16.mxu0 %v337
  %436 = vmatpush1.bf16.msra.mxu0 %v334
  %437 = vmatprep.subr.bf16.mxu0 0
  %438 = vmatpush2.bf16.msra.mxu0 0
  %439 = vmatprep.subr.bf16.mxu0 0
  %440 = vmatpush2.bf16.msra.mxu0 0
  %441 = vmatprep.subr.bf16.mxu0 0
  %442 = vmatpush2.bf16.msra.mxu0 0
  %443 = vmatprep.subr.bf16.mxu0 0
  %444 = vmatpush2.bf16.msra.mxu0 0
  %445 = vmatprep.subr.bf16.mxu0 0
  %446 = vmatpush2.bf16.msra.mxu0 0
  %447 = vmatprep.subr.bf16.mxu0 0
  %448 = vmatpush2.bf16.msra.mxu0 0
  %449 = vmatprep.subr.bf16.mxu0 0
  %450 = vmatpush2.bf16.msra.mxu0 0
  %451 = vmatprep.subr.bf16.mxu0 0
  %452 = vmatpush2.bf16.msra.mxu0 0
  %453 = vmatprep.mubr.bf16.mxu0 0
  %454 = vmatmul.mubr.bf16.gmra.mxu0 %v319
  %v455 = vpop.f32.mrf.mxu0
  %v456 = vadd.f32 %v312, %v455
  %v457 = vpop.f32.mrf.mxu0
  %v458 = vadd.f32 %v314, %v457
  %v459 = vpop.f32.mrf.mxu0
  %v460 = vpop.f32.mrf.mxu0
  %461 = vdwg.mxu0
  %s462 = scalar_lea.vmem %s0, 8
  %v463 = vld [vmem:[%s462] sm:$0xf]
  %464 = vrot.lane.b32.xlu0 %v122, 126
  %v465 = vpop.permute.xlu0 %464
  %466 = vrot.lane.b32.xlu0 %v130, 126
  %v467 = vpop.permute.xlu0 %466
  %468 = vrot.lane.b32.xlu0 %v129, 126
  %v469 = vpop.permute.xlu0 %468
  %470 = vrot.lane.b32.xlu0 %v131, 126
  %v471 = vpop.permute.xlu0 %470
  %472 = vrot.lane.b32.xlu0 %v138, 126
  %v473 = vpop.permute.xlu0 %472
  %474 = vrot.lane.b32.xlu0 %v139, 126
  %v475 = vpop.permute.xlu0 %474
  %476 = vrot.lane.b32.xlu0 %v147, 126
  %v477 = vpop.permute.xlu0 %476
  %vm478 = vcmask 1031168
  %v479 = vsel %vm478, %v465, %v467
  %v480 = vsel %vm478, %v467, %v469
  %v481 = vsel %vm478, %v469, %v471
  %v482 = vsel %vm478, %v471, %v473
  %v483 = vsel %vm478, %v473, %v475
  %v484 = vsel %vm478, %v475, %v477
  %v486 = vsel %vm172, %v463, 0
  %v489 = vsel %vm176, %v479, 0
  %v492 = vsel %vm176, %v480, 0
  %v495 = vsel %vm176, %v481, 0
  %v498 = vsel %vm176, %v482, 0
  %v501 = vsel %vm176, %v483, 0
  %v504 = vsel %vm176, %v484, 0
  %506 = vmatprep.subr.bf16.mxu0 0
  %507 = vmatpush1.bf16.msra.mxu0 0
  %508 = vmatprep.subr.bf16.mxu0 0
  %509 = vmatpush1.bf16.msra.mxu0 0
  %510 = vmatprep.subr.bf16.mxu0 0
  %511 = vmatpush1.bf16.msra.mxu0 0
  %512 = vmatprep.subr.bf16.mxu0 0
  %513 = vmatpush1.bf16.msra.mxu0 0
  %514 = vmatprep.subr.bf16.mxu0 0
  %515 = vmatpush1.bf16.msra.mxu0 0
  %516 = vmatprep.subr.bf16.mxu0 0
  %517 = vmatpush1.bf16.msra.mxu0 0
  %518 = vmatprep.subr.bf16.mxu0 0
  %519 = vmatpush1.bf16.msra.mxu0 0
  %520 = vmatprep.subr.bf16.mxu0 %v492
  %521 = vmatpush1.bf16.msra.mxu0 %v489
  %522 = vmatprep.subr.bf16.mxu0 0
  %523 = vmatpush2.bf16.msra.mxu0 0
  %524 = vmatprep.subr.bf16.mxu0 0
  %525 = vmatpush2.bf16.msra.mxu0 0
  %526 = vmatprep.subr.bf16.mxu0 0
  %527 = vmatpush2.bf16.msra.mxu0 0
  %528 = vmatprep.subr.bf16.mxu0 0
  %529 = vmatpush2.bf16.msra.mxu0 0
  %530 = vmatprep.subr.bf16.mxu0 0
  %531 = vmatpush2.bf16.msra.mxu0 0
  %532 = vmatprep.subr.bf16.mxu0 0
  %533 = vmatpush2.bf16.msra.mxu0 0
  %534 = vmatprep.subr.bf16.mxu0 0
  %535 = vmatpush2.bf16.msra.mxu0 0
  %536 = vmatprep.subr.bf16.mxu0 0
  %537 = vmatpush2.bf16.msra.mxu0 0
  %538 = vmatprep.mubr.bf16.mxu0 0
  %539 = vmatmul.mubr.bf16.gmra.mxu0 %v486
  %v540 = vpop.f32.mrf.mxu0
  %v541 = vadd.f32 0.0, %v540
  %v542 = vpop.f32.mrf.mxu0
  %v543 = vadd.f32 0.0, %v542
  %v544 = vpop.f32.mrf.mxu0
  %v545 = vpop.f32.mrf.mxu0
  %546 = vdwg.mxu0
  %547 = vmatprep.subr.bf16.mxu0 0
  %548 = vmatpush1.bf16.msra.mxu0 0
  %549 = vmatprep.subr.bf16.mxu0 0
  %550 = vmatpush1.bf16.msra.mxu0 0
  %551 = vmatprep.subr.bf16.mxu0 0
  %552 = vmatpush1.bf16.msra.mxu0 0
  %553 = vmatprep.subr.bf16.mxu0 0
  %554 = vmatpush1.bf16.msra.mxu0 0
  %555 = vmatprep.subr.bf16.mxu0 0
  %556 = vmatpush1.bf16.msra.mxu0 0
  %557 = vmatprep.subr.bf16.mxu0 0
  %558 = vmatpush1.bf16.msra.mxu0 0
  %559 = vmatprep.subr.bf16.mxu0 0
  %560 = vmatpush1.bf16.msra.mxu0 0
  %561 = vmatprep.subr.bf16.mxu0 %v498
  %562 = vmatpush1.bf16.msra.mxu0 %v495
  %563 = vmatprep.subr.bf16.mxu0 0
  %564 = vmatpush2.bf16.msra.mxu0 0
  %565 = vmatprep.subr.bf16.mxu0 0
  %566 = vmatpush2.bf16.msra.mxu0 0
  %567 = vmatprep.subr.bf16.mxu0 0
  %568 = vmatpush2.bf16.msra.mxu0 0
  %569 = vmatprep.subr.bf16.mxu0 0
  %570 = vmatpush2.bf16.msra.mxu0 0
  %571 = vmatprep.subr.bf16.mxu0 0
  %572 = vmatpush2.bf16.msra.mxu0 0
  %573 = vmatprep.subr.bf16.mxu0 0
  %574 = vmatpush2.bf16.msra.mxu0 0
  %575 = vmatprep.subr.bf16.mxu0 0
  %576 = vmatpush2.bf16.msra.mxu0 0
  %577 = vmatprep.subr.bf16.mxu0 0
  %578 = vmatpush2.bf16.msra.mxu0 0
  %579 = vmatprep.mubr.bf16.mxu0 0
  %580 = vmatmul.mubr.bf16.gmra.mxu0 %v486
  %v581 = vpop.f32.mrf.mxu0
  %v582 = vadd.f32 0.0, %v581
  %v583 = vpop.f32.mrf.mxu0
  %v584 = vadd.f32 0.0, %v583
  %v585 = vpop.f32.mrf.mxu0
  %v586 = vpop.f32.mrf.mxu0
  %587 = vdwg.mxu0
  %588 = vmatprep.subr.bf16.mxu0 0
  %589 = vmatpush1.bf16.msra.mxu0 0
  %590 = vmatprep.subr.bf16.mxu0 0
  %591 = vmatpush1.bf16.msra.mxu0 0
  %592 = vmatprep.subr.bf16.mxu0 0
  %593 = vmatpush1.bf16.msra.mxu0 0
  %594 = vmatprep.subr.bf16.mxu0 0
  %595 = vmatpush1.bf16.msra.mxu0 0
  %596 = vmatprep.subr.bf16.mxu0 0
  %597 = vmatpush1.bf16.msra.mxu0 0
  %598 = vmatprep.subr.bf16.mxu0 0
  %599 = vmatpush1.bf16.msra.mxu0 0
  %600 = vmatprep.subr.bf16.mxu0 0
  %601 = vmatpush1.bf16.msra.mxu0 0
  %602 = vmatprep.subr.bf16.mxu0 %v504
  %603 = vmatpush1.bf16.msra.mxu0 %v501
  %604 = vmatprep.subr.bf16.mxu0 0
  %605 = vmatpush2.bf16.msra.mxu0 0
  %606 = vmatprep.subr.bf16.mxu0 0
  %607 = vmatpush2.bf16.msra.mxu0 0
  %608 = vmatprep.subr.bf16.mxu0 0
  %609 = vmatpush2.bf16.msra.mxu0 0
  %610 = vmatprep.subr.bf16.mxu0 0
  %611 = vmatpush2.bf16.msra.mxu0 0
  %612 = vmatprep.subr.bf16.mxu0 0
  %613 = vmatpush2.bf16.msra.mxu0 0
  %614 = vmatprep.subr.bf16.mxu0 0
  %615 = vmatpush2.bf16.msra.mxu0 0
  %616 = vmatprep.subr.bf16.mxu0 0
  %617 = vmatpush2.bf16.msra.mxu0 0
  %618 = vmatprep.subr.bf16.mxu0 0
  %619 = vmatpush2.bf16.msra.mxu0 0
  %620 = vmatprep.mubr.bf16.mxu0 0
  %621 = vmatmul.mubr.bf16.gmra.mxu0 %v486
  %v622 = vpop.f32.mrf.mxu0
  %v623 = vadd.f32 0.0, %v622
  %v624 = vpop.f32.mrf.mxu0
  %v625 = vadd.f32 0.0, %v624
  %v626 = vpop.f32.mrf.mxu0
  %v627 = vpop.f32.mrf.mxu0
  %628 = vdwg.mxu0
  %v629 = vadd.f32 %v374, %v541
  %v630 = vadd.f32 %v376, %v543
  %v631 = vadd.f32 %v415, %v582
  %v632 = vadd.f32 %v417, %v584
  %v633 = vadd.f32 %v456, %v623
  %v634 = vadd.f32 %v458, %v625
  %s635 = scalar_lea.vmem %s0, 12
  %v636 = vld [vmem:[%s635] sm:$0xf]
  %637 = vrot.lane.b32.xlu0 %v122, 110
  %v638 = vpop.permute.xlu0 %637
  %639 = vrot.lane.b32.xlu0 %v130, 110
  %v640 = vpop.permute.xlu0 %639
  %641 = vrot.lane.b32.xlu0 %v129, 110
  %v642 = vpop.permute.xlu0 %641
  %643 = vrot.lane.b32.xlu0 %v131, 110
  %v644 = vpop.permute.xlu0 %643
  %645 = vrot.lane.b32.xlu0 %v138, 110
  %v646 = vpop.permute.xlu0 %645
  %647 = vrot.lane.b32.xlu0 %v139, 110
  %v648 = vpop.permute.xlu0 %647
  %649 = vrot.lane.b32.xlu0 %v147, 110
  %v650 = vpop.permute.xlu0 %649
  %vm651 = vcmask 900096
  %v652 = vsel %vm651, %v638, %v640
  %v653 = vsel %vm651, %v640, %v642
  %v654 = vsel %vm651, %v642, %v644
  %v655 = vsel %vm651, %v644, %v646
  %v656 = vsel %vm651, %v646, %v648
  %v657 = vsel %vm651, %v648, %v650
  %v659 = vsel %vm172, %v636, 0
  %v662 = vsel %vm176, %v652, 0
  %v665 = vsel %vm176, %v653, 0
  %v668 = vsel %vm176, %v654, 0
  %v671 = vsel %vm176, %v655, 0
  %v674 = vsel %vm176, %v656, 0
  %v677 = vsel %vm176, %v657, 0
  %679 = vmatprep.subr.bf16.mxu0 0
  %680 = vmatpush1.bf16.msra.mxu0 0
  %681 = vmatprep.subr.bf16.mxu0 0
  %682 = vmatpush1.bf16.msra.mxu0 0
  %683 = vmatprep.subr.bf16.mxu0 0
  %684 = vmatpush1.bf16.msra.mxu0 0
  %685 = vmatprep.subr.bf16.mxu0 0
  %686 = vmatpush1.bf16.msra.mxu0 0
  %687 = vmatprep.subr.bf16.mxu0 0
  %688 = vmatpush1.bf16.msra.mxu0 0
  %689 = vmatprep.subr.bf16.mxu0 0
  %690 = vmatpush1.bf16.msra.mxu0 0
  %691 = vmatprep.subr.bf16.mxu0 0
  %692 = vmatpush1.bf16.msra.mxu0 0
  %693 = vmatprep.subr.bf16.mxu0 %v665
  %694 = vmatpush1.bf16.msra.mxu0 %v662
  %695 = vmatprep.subr.bf16.mxu0 0
  %696 = vmatpush2.bf16.msra.mxu0 0
  %697 = vmatprep.subr.bf16.mxu0 0
  %698 = vmatpush2.bf16.msra.mxu0 0
  %699 = vmatprep.subr.bf16.mxu0 0
  %700 = vmatpush2.bf16.msra.mxu0 0
  %701 = vmatprep.subr.bf16.mxu0 0
  %702 = vmatpush2.bf16.msra.mxu0 0
  %703 = vmatprep.subr.bf16.mxu0 0
  %704 = vmatpush2.bf16.msra.mxu0 0
  %705 = vmatprep.subr.bf16.mxu0 0
  %706 = vmatpush2.bf16.msra.mxu0 0
  %707 = vmatprep.subr.bf16.mxu0 0
  %708 = vmatpush2.bf16.msra.mxu0 0
  %709 = vmatprep.subr.bf16.mxu0 0
  %710 = vmatpush2.bf16.msra.mxu0 0
  %711 = vmatprep.mubr.bf16.mxu0 0
  %712 = vmatmul.mubr.bf16.gmra.mxu0 %v659
  %v713 = vpop.f32.mrf.mxu0
  %v714 = vadd.f32 0.0, %v713
  %v715 = vpop.f32.mrf.mxu0
  %v716 = vadd.f32 0.0, %v715
  %v717 = vpop.f32.mrf.mxu0
  %v718 = vpop.f32.mrf.mxu0
  %719 = vdwg.mxu0
  %720 = vmatprep.subr.bf16.mxu0 0
  %721 = vmatpush1.bf16.msra.mxu0 0
  %722 = vmatprep.subr.bf16.mxu0 0
  %723 = vmatpush1.bf16.msra.mxu0 0
  %724 = vmatprep.subr.bf16.mxu0 0
  %725 = vmatpush1.bf16.msra.mxu0 0
  %726 = vmatprep.subr.bf16.mxu0 0
  %727 = vmatpush1.bf16.msra.mxu0 0
  %728 = vmatprep.subr.bf16.mxu0 0
  %729 = vmatpush1.bf16.msra.mxu0 0
  %730 = vmatprep.subr.bf16.mxu0 0
  %731 = vmatpush1.bf16.msra.mxu0 0
  %732 = vmatprep.subr.bf16.mxu0 0
  %733 = vmatpush1.bf16.msra.mxu0 0
  %734 = vmatprep.subr.bf16.mxu0 %v671
  %735 = vmatpush1.bf16.msra.mxu0 %v668
  %736 = vmatprep.subr.bf16.mxu0 0
  %737 = vmatpush2.bf16.msra.mxu0 0
  %738 = vmatprep.subr.bf16.mxu0 0
  %739 = vmatpush2.bf16.msra.mxu0 0
  %740 = vmatprep.subr.bf16.mxu0 0
  %741 = vmatpush2.bf16.msra.mxu0 0
  %742 = vmatprep.subr.bf16.mxu0 0
  %743 = vmatpush2.bf16.msra.mxu0 0
  %744 = vmatprep.subr.bf16.mxu0 0
  %745 = vmatpush2.bf16.msra.mxu0 0
  %746 = vmatprep.subr.bf16.mxu0 0
  %747 = vmatpush2.bf16.msra.mxu0 0
  %748 = vmatprep.subr.bf16.mxu0 0
  %749 = vmatpush2.bf16.msra.mxu0 0
  %750 = vmatprep.subr.bf16.mxu0 0
  %751 = vmatpush2.bf16.msra.mxu0 0
  %752 = vmatprep.mubr.bf16.mxu0 0
  %753 = vmatmul.mubr.bf16.gmra.mxu0 %v659
  %v754 = vpop.f32.mrf.mxu0
  %v755 = vadd.f32 0.0, %v754
  %v756 = vpop.f32.mrf.mxu0
  %v757 = vadd.f32 0.0, %v756
  %v758 = vpop.f32.mrf.mxu0
  %v759 = vpop.f32.mrf.mxu0
  %760 = vdwg.mxu0
  %761 = vmatprep.subr.bf16.mxu0 0
  %762 = vmatpush1.bf16.msra.mxu0 0
  %763 = vmatprep.subr.bf16.mxu0 0
  %764 = vmatpush1.bf16.msra.mxu0 0
  %765 = vmatprep.subr.bf16.mxu0 0
  %766 = vmatpush1.bf16.msra.mxu0 0
  %767 = vmatprep.subr.bf16.mxu0 0
  %768 = vmatpush1.bf16.msra.mxu0 0
  %769 = vmatprep.subr.bf16.mxu0 0
  %770 = vmatpush1.bf16.msra.mxu0 0
  %771 = vmatprep.subr.bf16.mxu0 0
  %772 = vmatpush1.bf16.msra.mxu0 0
  %773 = vmatprep.subr.bf16.mxu0 0
  %774 = vmatpush1.bf16.msra.mxu0 0
  %775 = vmatprep.subr.bf16.mxu0 %v677
  %776 = vmatpush1.bf16.msra.mxu0 %v674
  %777 = vmatprep.subr.bf16.mxu0 0
  %778 = vmatpush2.bf16.msra.mxu0 0
  %779 = vmatprep.subr.bf16.mxu0 0
  %780 = vmatpush2.bf16.msra.mxu0 0
  %781 = vmatprep.subr.bf16.mxu0 0
  %782 = vmatpush2.bf16.msra.mxu0 0
  %783 = vmatprep.subr.bf16.mxu0 0
  %784 = vmatpush2.bf16.msra.mxu0 0
  %785 = vmatprep.subr.bf16.mxu0 0
  %786 = vmatpush2.bf16.msra.mxu0 0
  %787 = vmatprep.subr.bf16.mxu0 0
  %788 = vmatpush2.bf16.msra.mxu0 0
  %789 = vmatprep.subr.bf16.mxu0 0
  %790 = vmatpush2.bf16.msra.mxu0 0
  %791 = vmatprep.subr.bf16.mxu0 0
  %792 = vmatpush2.bf16.msra.mxu0 0
  %793 = vmatprep.mubr.bf16.mxu0 0
  %794 = vmatmul.mubr.bf16.gmra.mxu0 %v659
  %v795 = vpop.f32.mrf.mxu0
  %v796 = vadd.f32 0.0, %v795
  %v797 = vpop.f32.mrf.mxu0
  %v798 = vadd.f32 0.0, %v797
  %v799 = vpop.f32.mrf.mxu0
  %v800 = vpop.f32.mrf.mxu0
  %801 = vdwg.mxu0
  %v802 = vadd.f32 %v629, %v714
  %v803 = vadd.f32 %v630, %v716
  %v804 = vadd.f32 %v631, %v755
  %v805 = vadd.f32 %v632, %v757
  %v806 = vadd.f32 %v633, %v796
  %v807 = vadd.f32 %v634, %v798
  %s808 = scalar_lea.vmem %s0, 16
  %v809 = vld [vmem:[%s808] sm:$0xf]
  %810 = vrot.lane.b32.xlu0 %v122, 109
  %v811 = vpop.permute.xlu0 %810
  %812 = vrot.lane.b32.xlu0 %v130, 109
  %v813 = vpop.permute.xlu0 %812
  %814 = vrot.lane.b32.xlu0 %v129, 109
  %v815 = vpop.permute.xlu0 %814
  %816 = vrot.lane.b32.xlu0 %v131, 109
  %v817 = vpop.permute.xlu0 %816
  %818 = vrot.lane.b32.xlu0 %v138, 109
  %v819 = vpop.permute.xlu0 %818
  %820 = vrot.lane.b32.xlu0 %v139, 109
  %v821 = vpop.permute.xlu0 %820
  %822 = vrot.lane.b32.xlu0 %v147, 109
  %v823 = vpop.permute.xlu0 %822
  %vm824 = vcmask 891904
  %v825 = vsel %vm824, %v811, %v813
  %v826 = vsel %vm824, %v813, %v815
  %v827 = vsel %vm824, %v815, %v817
  %v828 = vsel %vm824, %v817, %v819
  %v829 = vsel %vm824, %v819, %v821
  %v830 = vsel %vm824, %v821, %v823
  %v832 = vsel %vm172, %v809, 0
  %v835 = vsel %vm176, %v825, 0
  %v838 = vsel %vm176, %v826, 0
  %v841 = vsel %vm176, %v827, 0
  %v844 = vsel %vm176, %v828, 0
  %v847 = vsel %vm176, %v829, 0
  %v850 = vsel %vm176, %v830, 0
  %852 = vmatprep.subr.bf16.mxu0 0
  %853 = vmatpush1.bf16.msra.mxu0 0
  %854 = vmatprep.subr.bf16.mxu0 0
  %855 = vmatpush1.bf16.msra.mxu0 0
  %856 = vmatprep.subr.bf16.mxu0 0
  %857 = vmatpush1.bf16.msra.mxu0 0
  %858 = vmatprep.subr.bf16.mxu0 0
  %859 = vmatpush1.bf16.msra.mxu0 0
  %860 = vmatprep.subr.bf16.mxu0 0
  %861 = vmatpush1.bf16.msra.mxu0 0
  %862 = vmatprep.subr.bf16.mxu0 0
  %863 = vmatpush1.bf16.msra.mxu0 0
  %864 = vmatprep.subr.bf16.mxu0 0
  %865 = vmatpush1.bf16.msra.mxu0 0
  %866 = vmatprep.subr.bf16.mxu0 %v838
  %867 = vmatpush1.bf16.msra.mxu0 %v835
  %868 = vmatprep.subr.bf16.mxu0 0
  %869 = vmatpush2.bf16.msra.mxu0 0
  %870 = vmatprep.subr.bf16.mxu0 0
  %871 = vmatpush2.bf16.msra.mxu0 0
  %872 = vmatprep.subr.bf16.mxu0 0
  %873 = vmatpush2.bf16.msra.mxu0 0
  %874 = vmatprep.subr.bf16.mxu0 0
  %875 = vmatpush2.bf16.msra.mxu0 0
  %876 = vmatprep.subr.bf16.mxu0 0
  %877 = vmatpush2.bf16.msra.mxu0 0
  %878 = vmatprep.subr.bf16.mxu0 0
  %879 = vmatpush2.bf16.msra.mxu0 0
  %880 = vmatprep.subr.bf16.mxu0 0
  %881 = vmatpush2.bf16.msra.mxu0 0
  %882 = vmatprep.subr.bf16.mxu0 0
  %883 = vmatpush2.bf16.msra.mxu0 0
  %884 = vmatprep.mubr.bf16.mxu0 0
  %885 = vmatmul.mubr.bf16.gmra.mxu0 %v832
  %v886 = vpop.f32.mrf.mxu0
  %v887 = vadd.f32 0.0, %v886
  %v888 = vpop.f32.mrf.mxu0
  %v889 = vadd.f32 0.0, %v888
  %v890 = vpop.f32.mrf.mxu0
  %v891 = vpop.f32.mrf.mxu0
  %892 = vdwg.mxu0
  %893 = vmatprep.subr.bf16.mxu0 0
  %894 = vmatpush1.bf16.msra.mxu0 0
  %895 = vmatprep.subr.bf16.mxu0 0
  %896 = vmatpush1.bf16.msra.mxu0 0
  %897 = vmatprep.subr.bf16.mxu0 0
  %898 = vmatpush1.bf16.msra.mxu0 0
  %899 = vmatprep.subr.bf16.mxu0 0
  %900 = vmatpush1.bf16.msra.mxu0 0
  %901 = vmatprep.subr.bf16.mxu0 0
  %902 = vmatpush1.bf16.msra.mxu0 0
  %903 = vmatprep.subr.bf16.mxu0 0
  %904 = vmatpush1.bf16.msra.mxu0 0
  %905 = vmatprep.subr.bf16.mxu0 0
  %906 = vmatpush1.bf16.msra.mxu0 0
  %907 = vmatprep.subr.bf16.mxu0 %v844
  %908 = vmatpush1.bf16.msra.mxu0 %v841
  %909 = vmatprep.subr.bf16.mxu0 0
  %910 = vmatpush2.bf16.msra.mxu0 0
  %911 = vmatprep.subr.bf16.mxu0 0
  %912 = vmatpush2.bf16.msra.mxu0 0
  %913 = vmatprep.subr.bf16.mxu0 0
  %914 = vmatpush2.bf16.msra.mxu0 0
  %915 = vmatprep.subr.bf16.mxu0 0
  %916 = vmatpush2.bf16.msra.mxu0 0
  %917 = vmatprep.subr.bf16.mxu0 0
  %918 = vmatpush2.bf16.msra.mxu0 0
  %919 = vmatprep.subr.bf16.mxu0 0
  %920 = vmatpush2.bf16.msra.mxu0 0
  %921 = vmatprep.subr.bf16.mxu0 0
  %922 = vmatpush2.bf16.msra.mxu0 0
  %923 = vmatprep.subr.bf16.mxu0 0
  %924 = vmatpush2.bf16.msra.mxu0 0
  %925 = vmatprep.mubr.bf16.mxu0 0
  %926 = vmatmul.mubr.bf16.gmra.mxu0 %v832
  %v927 = vpop.f32.mrf.mxu0
  %v928 = vadd.f32 0.0, %v927
  %v929 = vpop.f32.mrf.mxu0
  %v930 = vadd.f32 0.0, %v929
  %v931 = vpop.f32.mrf.mxu0
  %v932 = vpop.f32.mrf.mxu0
  %933 = vdwg.mxu0
  %934 = vmatprep.subr.bf16.mxu0 0
  %935 = vmatpush1.bf16.msra.mxu0 0
  %936 = vmatprep.subr.bf16.mxu0 0
  %937 = vmatpush1.bf16.msra.mxu0 0
  %938 = vmatprep.subr.bf16.mxu0 0
  %939 = vmatpush1.bf16.msra.mxu0 0
  %940 = vmatprep.subr.bf16.mxu0 0
  %941 = vmatpush1.bf16.msra.mxu0 0
  %942 = vmatprep.subr.bf16.mxu0 0
  %943 = vmatpush1.bf16.msra.mxu0 0
  %944 = vmatprep.subr.bf16.mxu0 0
  %945 = vmatpush1.bf16.msra.mxu0 0
  %946 = vmatprep.subr.bf16.mxu0 0
  %947 = vmatpush1.bf16.msra.mxu0 0
  %948 = vmatprep.subr.bf16.mxu0 %v850
  %949 = vmatpush1.bf16.msra.mxu0 %v847
  %950 = vmatprep.subr.bf16.mxu0 0
  %951 = vmatpush2.bf16.msra.mxu0 0
  %952 = vmatprep.subr.bf16.mxu0 0
  %953 = vmatpush2.bf16.msra.mxu0 0
  %954 = vmatprep.subr.bf16.mxu0 0
  %955 = vmatpush2.bf16.msra.mxu0 0
  %956 = vmatprep.subr.bf16.mxu0 0
  %957 = vmatpush2.bf16.msra.mxu0 0
  %958 = vmatprep.subr.bf16.mxu0 0
  %959 = vmatpush2.bf16.msra.mxu0 0
  %960 = vmatprep.subr.bf16.mxu0 0
  %961 = vmatpush2.bf16.msra.mxu0 0
  %962 = vmatprep.subr.bf16.mxu0 0
  %963 = vmatpush2.bf16.msra.mxu0 0
  %964 = vmatprep.subr.bf16.mxu0 0
  %965 = vmatpush2.bf16.msra.mxu0 0
  %966 = vmatprep.mubr.bf16.mxu0 0
  %967 = vmatmul.mubr.bf16.gmra.mxu0 %v832
  %v968 = vpop.f32.mrf.mxu0
  %v969 = vadd.f32 0.0, %v968
  %v970 = vpop.f32.mrf.mxu0
  %v971 = vadd.f32 0.0, %v970
  %v972 = vpop.f32.mrf.mxu0
  %v973 = vpop.f32.mrf.mxu0
  %974 = vdwg.mxu0
  %v975 = vadd.f32 %v802, %v887
  %v976 = vadd.f32 %v803, %v889
  %v977 = vadd.f32 %v804, %v928
  %v978 = vadd.f32 %v805, %v930
  %v979 = vadd.f32 %v806, %v969
  %v980 = vadd.f32 %v807, %v971
  %s981 = scalar_lea.vmem %s0, 20
  %v982 = vld [vmem:[%s981] sm:$0xf]
  %983 = vrot.lane.b32.xlu0 %v122, 108
  %v984 = vpop.permute.xlu0 %983
  %985 = vrot.lane.b32.xlu0 %v130, 108
  %v986 = vpop.permute.xlu0 %985
  %987 = vrot.lane.b32.xlu0 %v129, 108
  %v988 = vpop.permute.xlu0 %987
  %989 = vrot.lane.b32.xlu0 %v131, 108
  %v990 = vpop.permute.xlu0 %989
  %991 = vrot.lane.b32.xlu0 %v138, 108
  %v992 = vpop.permute.xlu0 %991
  %993 = vrot.lane.b32.xlu0 %v139, 108
  %v994 = vpop.permute.xlu0 %993
  %995 = vrot.lane.b32.xlu0 %v147, 108
  %v996 = vpop.permute.xlu0 %995
  %vm997 = vcmask 883712
  %v998 = vsel %vm997, %v984, %v986
  %v999 = vsel %vm997, %v986, %v988
  %v1000 = vsel %vm997, %v988, %v990
  %v1001 = vsel %vm997, %v990, %v992
  %v1002 = vsel %vm997, %v992, %v994
  %v1003 = vsel %vm997, %v994, %v996
  %v1005 = vsel %vm172, %v982, 0
  %v1008 = vsel %vm176, %v998, 0
  %v1011 = vsel %vm176, %v999, 0
  %v1014 = vsel %vm176, %v1000, 0
  %v1017 = vsel %vm176, %v1001, 0
  %v1020 = vsel %vm176, %v1002, 0
  %v1023 = vsel %vm176, %v1003, 0
  %1025 = vmatprep.subr.bf16.mxu0 0
  %1026 = vmatpush1.bf16.msra.mxu0 0
  %1027 = vmatprep.subr.bf16.mxu0 0
  %1028 = vmatpush1.bf16.msra.mxu0 0
  %1029 = vmatprep.subr.bf16.mxu0 0
  %1030 = vmatpush1.bf16.msra.mxu0 0
  %1031 = vmatprep.subr.bf16.mxu0 0
  %1032 = vmatpush1.bf16.msra.mxu0 0
  %1033 = vmatprep.subr.bf16.mxu0 0
  %1034 = vmatpush1.bf16.msra.mxu0 0
  %1035 = vmatprep.subr.bf16.mxu0 0
  %1036 = vmatpush1.bf16.msra.mxu0 0
  %1037 = vmatprep.subr.bf16.mxu0 0
  %1038 = vmatpush1.bf16.msra.mxu0 0
  %1039 = vmatprep.subr.bf16.mxu0 %v1011
  %1040 = vmatpush1.bf16.msra.mxu0 %v1008
  %1041 = vmatprep.subr.bf16.mxu0 0
  %1042 = vmatpush2.bf16.msra.mxu0 0
  %1043 = vmatprep.subr.bf16.mxu0 0
  %1044 = vmatpush2.bf16.msra.mxu0 0
  %1045 = vmatprep.subr.bf16.mxu0 0
  %1046 = vmatpush2.bf16.msra.mxu0 0
  %1047 = vmatprep.subr.bf16.mxu0 0
  %1048 = vmatpush2.bf16.msra.mxu0 0
  %1049 = vmatprep.subr.bf16.mxu0 0
  %1050 = vmatpush2.bf16.msra.mxu0 0
  %1051 = vmatprep.subr.bf16.mxu0 0
  %1052 = vmatpush2.bf16.msra.mxu0 0
  %1053 = vmatprep.subr.bf16.mxu0 0
  %1054 = vmatpush2.bf16.msra.mxu0 0
  %1055 = vmatprep.subr.bf16.mxu0 0
  %1056 = vmatpush2.bf16.msra.mxu0 0
  %1057 = vmatprep.mubr.bf16.mxu0 0
  %1058 = vmatmul.mubr.bf16.gmra.mxu0 %v1005
  %v1059 = vpop.f32.mrf.mxu0
  %v1060 = vadd.f32 0.0, %v1059
  %v1061 = vpop.f32.mrf.mxu0
  %v1062 = vadd.f32 0.0, %v1061
  %v1063 = vpop.f32.mrf.mxu0
  %v1064 = vpop.f32.mrf.mxu0
  %1065 = vdwg.mxu0
  %1066 = vmatprep.subr.bf16.mxu0 0
  %1067 = vmatpush1.bf16.msra.mxu0 0
  %1068 = vmatprep.subr.bf16.mxu0 0
  %1069 = vmatpush1.bf16.msra.mxu0 0
  %1070 = vmatprep.subr.bf16.mxu0 0
  %1071 = vmatpush1.bf16.msra.mxu0 0
  %1072 = vmatprep.subr.bf16.mxu0 0
  %1073 = vmatpush1.bf16.msra.mxu0 0
  %1074 = vmatprep.subr.bf16.mxu0 0
  %1075 = vmatpush1.bf16.msra.mxu0 0
  %1076 = vmatprep.subr.bf16.mxu0 0
  %1077 = vmatpush1.bf16.msra.mxu0 0
  %1078 = vmatprep.subr.bf16.mxu0 0
  %1079 = vmatpush1.bf16.msra.mxu0 0
  %1080 = vmatprep.subr.bf16.mxu0 %v1017
  %1081 = vmatpush1.bf16.msra.mxu0 %v1014
  %1082 = vmatprep.subr.bf16.mxu0 0
  %1083 = vmatpush2.bf16.msra.mxu0 0
  %1084 = vmatprep.subr.bf16.mxu0 0
  %1085 = vmatpush2.bf16.msra.mxu0 0
  %1086 = vmatprep.subr.bf16.mxu0 0
  %1087 = vmatpush2.bf16.msra.mxu0 0
  %1088 = vmatprep.subr.bf16.mxu0 0
  %1089 = vmatpush2.bf16.msra.mxu0 0
  %1090 = vmatprep.subr.bf16.mxu0 0
  %1091 = vmatpush2.bf16.msra.mxu0 0
  %1092 = vmatprep.subr.bf16.mxu0 0
  %1093 = vmatpush2.bf16.msra.mxu0 0
  %1094 = vmatprep.subr.bf16.mxu0 0
  %1095 = vmatpush2.bf16.msra.mxu0 0
  %1096 = vmatprep.subr.bf16.mxu0 0
  %1097 = vmatpush2.bf16.msra.mxu0 0
  %1098 = vmatprep.mubr.bf16.mxu0 0
  %1099 = vmatmul.mubr.bf16.gmra.mxu0 %v1005
  %v1100 = vpop.f32.mrf.mxu0
  %v1101 = vadd.f32 0.0, %v1100
  %v1102 = vpop.f32.mrf.mxu0
  %v1103 = vadd.f32 0.0, %v1102
  %v1104 = vpop.f32.mrf.mxu0
  %v1105 = vpop.f32.mrf.mxu0
  %1106 = vdwg.mxu0
  %1107 = vmatprep.subr.bf16.mxu0 0
  %1108 = vmatpush1.bf16.msra.mxu0 0
  %1109 = vmatprep.subr.bf16.mxu0 0
  %1110 = vmatpush1.bf16.msra.mxu0 0
  %1111 = vmatprep.subr.bf16.mxu0 0
  %1112 = vmatpush1.bf16.msra.mxu0 0
  %1113 = vmatprep.subr.bf16.mxu0 0
  %1114 = vmatpush1.bf16.msra.mxu0 0
  %1115 = vmatprep.subr.bf16.mxu0 0
  %1116 = vmatpush1.bf16.msra.mxu0 0
  %1117 = vmatprep.subr.bf16.mxu0 0
  %1118 = vmatpush1.bf16.msra.mxu0 0
  %1119 = vmatprep.subr.bf16.mxu0 0
  %1120 = vmatpush1.bf16.msra.mxu0 0
  %1121 = vmatprep.subr.bf16.mxu0 %v1023
  %1122 = vmatpush1.bf16.msra.mxu0 %v1020
  %1123 = vmatprep.subr.bf16.mxu0 0
  %1124 = vmatpush2.bf16.msra.mxu0 0
  %1125 = vmatprep.subr.bf16.mxu0 0
  %1126 = vmatpush2.bf16.msra.mxu0 0
  %1127 = vmatprep.subr.bf16.mxu0 0
  %1128 = vmatpush2.bf16.msra.mxu0 0
  %1129 = vmatprep.subr.bf16.mxu0 0
  %1130 = vmatpush2.bf16.msra.mxu0 0
  %1131 = vmatprep.subr.bf16.mxu0 0
  %1132 = vmatpush2.bf16.msra.mxu0 0
  %1133 = vmatprep.subr.bf16.mxu0 0
  %1134 = vmatpush2.bf16.msra.mxu0 0
  %1135 = vmatprep.subr.bf16.mxu0 0
  %1136 = vmatpush2.bf16.msra.mxu0 0
  %1137 = vmatprep.subr.bf16.mxu0 0
  %1138 = vmatpush2.bf16.msra.mxu0 0
  %1139 = vmatprep.mubr.bf16.mxu0 0
  %1140 = vmatmul.mubr.bf16.gmra.mxu0 %v1005
  %v1141 = vpop.f32.mrf.mxu0
  %v1142 = vadd.f32 0.0, %v1141
  %v1143 = vpop.f32.mrf.mxu0
  %v1144 = vadd.f32 0.0, %v1143
  %v1145 = vpop.f32.mrf.mxu0
  %v1146 = vpop.f32.mrf.mxu0
  %1147 = vdwg.mxu0
  %v1148 = vadd.f32 %v975, %v1060
  %v1149 = vadd.f32 %v976, %v1062
  %v1150 = vadd.f32 %v977, %v1101
  %v1151 = vadd.f32 %v978, %v1103
  %v1152 = vadd.f32 %v979, %v1142
  %v1153 = vadd.f32 %v980, %v1144
  %s1154 = scalar_lea.vmem %s0, 24
  %v1155 = vld [vmem:[%s1154] sm:$0xf]
  %1156 = vrot.lane.b32.xlu0 %v122, 92
  %v1157 = vpop.permute.xlu0 %1156
  %1158 = vrot.lane.b32.xlu0 %v130, 92
  %v1159 = vpop.permute.xlu0 %1158
  %1160 = vrot.lane.b32.xlu0 %v129, 92
  %v1161 = vpop.permute.xlu0 %1160
  %1162 = vrot.lane.b32.xlu0 %v131, 92
  %v1163 = vpop.permute.xlu0 %1162
  %1164 = vrot.lane.b32.xlu0 %v138, 92
  %v1165 = vpop.permute.xlu0 %1164
  %1166 = vrot.lane.b32.xlu0 %v139, 92
  %v1167 = vpop.permute.xlu0 %1166
  %1168 = vrot.lane.b32.xlu0 %v147, 92
  %v1169 = vpop.permute.xlu0 %1168
  %vm1170 = vcmask 752640
  %v1171 = vsel %vm1170, %v1157, %v1159
  %v1172 = vsel %vm1170, %v1159, %v1161
  %v1173 = vsel %vm1170, %v1161, %v1163
  %v1174 = vsel %vm1170, %v1163, %v1165
  %v1175 = vsel %vm1170, %v1165, %v1167
  %v1176 = vsel %vm1170, %v1167, %v1169
  %v1178 = vsel %vm172, %v1155, 0
  %v1181 = vsel %vm176, %v1171, 0
  %v1184 = vsel %vm176, %v1172, 0
  %v1187 = vsel %vm176, %v1173, 0
  %v1190 = vsel %vm176, %v1174, 0
  %v1193 = vsel %vm176, %v1175, 0
  %v1196 = vsel %vm176, %v1176, 0
  %1198 = vmatprep.subr.bf16.mxu0 0
  %1199 = vmatpush1.bf16.msra.mxu0 0
  %1200 = vmatprep.subr.bf16.mxu0 0
  %1201 = vmatpush1.bf16.msra.mxu0 0
  %1202 = vmatprep.subr.bf16.mxu0 0
  %1203 = vmatpush1.bf16.msra.mxu0 0
  %1204 = vmatprep.subr.bf16.mxu0 0
  %1205 = vmatpush1.bf16.msra.mxu0 0
  %1206 = vmatprep.subr.bf16.mxu0 0
  %1207 = vmatpush1.bf16.msra.mxu0 0
  %1208 = vmatprep.subr.bf16.mxu0 0
  %1209 = vmatpush1.bf16.msra.mxu0 0
  %1210 = vmatprep.subr.bf16.mxu0 0
  %1211 = vmatpush1.bf16.msra.mxu0 0
  %1212 = vmatprep.subr.bf16.mxu0 %v1184
  %1213 = vmatpush1.bf16.msra.mxu0 %v1181
  %1214 = vmatprep.subr.bf16.mxu0 0
  %1215 = vmatpush2.bf16.msra.mxu0 0
  %1216 = vmatprep.subr.bf16.mxu0 0
  %1217 = vmatpush2.bf16.msra.mxu0 0
  %1218 = vmatprep.subr.bf16.mxu0 0
  %1219 = vmatpush2.bf16.msra.mxu0 0
  %1220 = vmatprep.subr.bf16.mxu0 0
  %1221 = vmatpush2.bf16.msra.mxu0 0
  %1222 = vmatprep.subr.bf16.mxu0 0
  %1223 = vmatpush2.bf16.msra.mxu0 0
  %1224 = vmatprep.subr.bf16.mxu0 0
  %1225 = vmatpush2.bf16.msra.mxu0 0
  %1226 = vmatprep.subr.bf16.mxu0 0
  %1227 = vmatpush2.bf16.msra.mxu0 0
  %1228 = vmatprep.subr.bf16.mxu0 0
  %1229 = vmatpush2.bf16.msra.mxu0 0
  %1230 = vmatprep.mubr.bf16.mxu0 0
  %1231 = vmatmul.mubr.bf16.gmra.mxu0 %v1178
  %v1232 = vpop.f32.mrf.mxu0
  %v1233 = vadd.f32 0.0, %v1232
  %v1234 = vpop.f32.mrf.mxu0
  %v1235 = vadd.f32 0.0, %v1234
  %v1236 = vpop.f32.mrf.mxu0
  %v1237 = vpop.f32.mrf.mxu0
  %1238 = vdwg.mxu0
  %1239 = vmatprep.subr.bf16.mxu0 0
  %1240 = vmatpush1.bf16.msra.mxu0 0
  %1241 = vmatprep.subr.bf16.mxu0 0
  %1242 = vmatpush1.bf16.msra.mxu0 0
  %1243 = vmatprep.subr.bf16.mxu0 0
  %1244 = vmatpush1.bf16.msra.mxu0 0
  %1245 = vmatprep.subr.bf16.mxu0 0
  %1246 = vmatpush1.bf16.msra.mxu0 0
  %1247 = vmatprep.subr.bf16.mxu0 0
  %1248 = vmatpush1.bf16.msra.mxu0 0
  %1249 = vmatprep.subr.bf16.mxu0 0
  %1250 = vmatpush1.bf16.msra.mxu0 0
  %1251 = vmatprep.subr.bf16.mxu0 0
  %1252 = vmatpush1.bf16.msra.mxu0 0
  %1253 = vmatprep.subr.bf16.mxu0 %v1190
  %1254 = vmatpush1.bf16.msra.mxu0 %v1187
  %1255 = vmatprep.subr.bf16.mxu0 0
  %1256 = vmatpush2.bf16.msra.mxu0 0
  %1257 = vmatprep.subr.bf16.mxu0 0
  %1258 = vmatpush2.bf16.msra.mxu0 0
  %1259 = vmatprep.subr.bf16.mxu0 0
  %1260 = vmatpush2.bf16.msra.mxu0 0
  %1261 = vmatprep.subr.bf16.mxu0 0
  %1262 = vmatpush2.bf16.msra.mxu0 0
  %1263 = vmatprep.subr.bf16.mxu0 0
  %1264 = vmatpush2.bf16.msra.mxu0 0
  %1265 = vmatprep.subr.bf16.mxu0 0
  %1266 = vmatpush2.bf16.msra.mxu0 0
  %1267 = vmatprep.subr.bf16.mxu0 0
  %1268 = vmatpush2.bf16.msra.mxu0 0
  %1269 = vmatprep.subr.bf16.mxu0 0
  %1270 = vmatpush2.bf16.msra.mxu0 0
  %1271 = vmatprep.mubr.bf16.mxu0 0
  %1272 = vmatmul.mubr.bf16.gmra.mxu0 %v1178
  %v1273 = vpop.f32.mrf.mxu0
  %v1274 = vadd.f32 0.0, %v1273
  %v1275 = vpop.f32.mrf.mxu0
  %v1276 = vadd.f32 0.0, %v1275
  %v1277 = vpop.f32.mrf.mxu0
  %v1278 = vpop.f32.mrf.mxu0
  %1279 = vdwg.mxu0
  %1280 = vmatprep.subr.bf16.mxu0 0
  %1281 = vmatpush1.bf16.msra.mxu0 0
  %1282 = vmatprep.subr.bf16.mxu0 0
  %1283 = vmatpush1.bf16.msra.mxu0 0
  %1284 = vmatprep.subr.bf16.mxu0 0
  %1285 = vmatpush1.bf16.msra.mxu0 0
  %1286 = vmatprep.subr.bf16.mxu0 0
  %1287 = vmatpush1.bf16.msra.mxu0 0
  %1288 = vmatprep.subr.bf16.mxu0 0
  %1289 = vmatpush1.bf16.msra.mxu0 0
  %1290 = vmatprep.subr.bf16.mxu0 0
  %1291 = vmatpush1.bf16.msra.mxu0 0
  %1292 = vmatprep.subr.bf16.mxu0 0
  %1293 = vmatpush1.bf16.msra.mxu0 0
  %1294 = vmatprep.subr.bf16.mxu0 %v1196
  %1295 = vmatpush1.bf16.msra.mxu0 %v1193
  %1296 = vmatprep.subr.bf16.mxu0 0
  %1297 = vmatpush2.bf16.msra.mxu0 0
  %1298 = vmatprep.subr.bf16.mxu0 0
  %1299 = vmatpush2.bf16.msra.mxu0 0
  %1300 = vmatprep.subr.bf16.mxu0 0
  %1301 = vmatpush2.bf16.msra.mxu0 0
  %1302 = vmatprep.subr.bf16.mxu0 0
  %1303 = vmatpush2.bf16.msra.mxu0 0
  %1304 = vmatprep.subr.bf16.mxu0 0
  %1305 = vmatpush2.bf16.msra.mxu0 0
  %1306 = vmatprep.subr.bf16.mxu0 0
  %1307 = vmatpush2.bf16.msra.mxu0 0
  %1308 = vmatprep.subr.bf16.mxu0 0
  %1309 = vmatpush2.bf16.msra.mxu0 0
  %1310 = vmatprep.subr.bf16.mxu0 0
  %1311 = vmatpush2.bf16.msra.mxu0 0
  %1312 = vmatprep.mubr.bf16.mxu0 0
  %1313 = vmatmul.mubr.bf16.gmra.mxu0 %v1178
  %v1314 = vpop.f32.mrf.mxu0
  %v1315 = vadd.f32 0.0, %v1314
  %v1316 = vpop.f32.mrf.mxu0
  %v1317 = vadd.f32 0.0, %v1316
  %v1318 = vpop.f32.mrf.mxu0
  %v1319 = vpop.f32.mrf.mxu0
  %1320 = vdwg.mxu0
  %v1321 = vadd.f32 %v1148, %v1233
  %v1322 = vadd.f32 %v1149, %v1235
  %v1323 = vadd.f32 %v1150, %v1274
  %v1324 = vadd.f32 %v1151, %v1276
  %v1325 = vadd.f32 %v1152, %v1315
  %v1326 = vadd.f32 %v1153, %v1317
  %s1327 = scalar_lea.vmem %s0, 28
  %v1328 = vld [vmem:[%s1327] sm:$0xf]
  %1329 = vrot.lane.b32.xlu0 %v122, 91
  %v1330 = vpop.permute.xlu0 %1329
  %1331 = vrot.lane.b32.xlu0 %v130, 91
  %v1332 = vpop.permute.xlu0 %1331
  %1333 = vrot.lane.b32.xlu0 %v129, 91
  %v1334 = vpop.permute.xlu0 %1333
  %1335 = vrot.lane.b32.xlu0 %v131, 91
  %v1336 = vpop.permute.xlu0 %1335
  %1337 = vrot.lane.b32.xlu0 %v138, 91
  %v1338 = vpop.permute.xlu0 %1337
  %1339 = vrot.lane.b32.xlu0 %v139, 91
  %v1340 = vpop.permute.xlu0 %1339
  %1341 = vrot.lane.b32.xlu0 %v147, 91
  %v1342 = vpop.permute.xlu0 %1341
  %vm1343 = vcmask 744448
  %v1344 = vsel %vm1343, %v1330, %v1332
  %v1345 = vsel %vm1343, %v1332, %v1334
  %v1346 = vsel %vm1343, %v1334, %v1336
  %v1347 = vsel %vm1343, %v1336, %v1338
  %v1348 = vsel %vm1343, %v1338, %v1340
  %v1349 = vsel %vm1343, %v1340, %v1342
  %v1351 = vsel %vm172, %v1328, 0
  %v1354 = vsel %vm176, %v1344, 0
  %v1357 = vsel %vm176, %v1345, 0
  %v1360 = vsel %vm176, %v1346, 0
  %v1363 = vsel %vm176, %v1347, 0
  %v1366 = vsel %vm176, %v1348, 0
  %v1369 = vsel %vm176, %v1349, 0
  %1371 = vmatprep.subr.bf16.mxu0 0
  %1372 = vmatpush1.bf16.msra.mxu0 0
  %1373 = vmatprep.subr.bf16.mxu0 0
  %1374 = vmatpush1.bf16.msra.mxu0 0
  %1375 = vmatprep.subr.bf16.mxu0 0
  %1376 = vmatpush1.bf16.msra.mxu0 0
  %1377 = vmatprep.subr.bf16.mxu0 0
  %1378 = vmatpush1.bf16.msra.mxu0 0
  %1379 = vmatprep.subr.bf16.mxu0 0
  %1380 = vmatpush1.bf16.msra.mxu0 0
  %1381 = vmatprep.subr.bf16.mxu0 0
  %1382 = vmatpush1.bf16.msra.mxu0 0
  %1383 = vmatprep.subr.bf16.mxu0 0
  %1384 = vmatpush1.bf16.msra.mxu0 0
  %1385 = vmatprep.subr.bf16.mxu0 %v1357
  %1386 = vmatpush1.bf16.msra.mxu0 %v1354
  %1387 = vmatprep.subr.bf16.mxu0 0
  %1388 = vmatpush2.bf16.msra.mxu0 0
  %1389 = vmatprep.subr.bf16.mxu0 0
  %1390 = vmatpush2.bf16.msra.mxu0 0
  %1391 = vmatprep.subr.bf16.mxu0 0
  %1392 = vmatpush2.bf16.msra.mxu0 0
  %1393 = vmatprep.subr.bf16.mxu0 0
  %1394 = vmatpush2.bf16.msra.mxu0 0
  %1395 = vmatprep.subr.bf16.mxu0 0
  %1396 = vmatpush2.bf16.msra.mxu0 0
  %1397 = vmatprep.subr.bf16.mxu0 0
  %1398 = vmatpush2.bf16.msra.mxu0 0
  %1399 = vmatprep.subr.bf16.mxu0 0
  %1400 = vmatpush2.bf16.msra.mxu0 0
  %1401 = vmatprep.subr.bf16.mxu0 0
  %1402 = vmatpush2.bf16.msra.mxu0 0
  %1403 = vmatprep.mubr.bf16.mxu0 0
  %1404 = vmatmul.mubr.bf16.gmra.mxu0 %v1351
  %v1405 = vpop.f32.mrf.mxu0
  %v1406 = vadd.f32 0.0, %v1405
  %v1407 = vpop.f32.mrf.mxu0
  %v1408 = vadd.f32 0.0, %v1407
  %v1409 = vpop.f32.mrf.mxu0
  %v1410 = vpop.f32.mrf.mxu0
  %1411 = vdwg.mxu0
  %1412 = vmatprep.subr.bf16.mxu0 0
  %1413 = vmatpush1.bf16.msra.mxu0 0
  %1414 = vmatprep.subr.bf16.mxu0 0
  %1415 = vmatpush1.bf16.msra.mxu0 0
  %1416 = vmatprep.subr.bf16.mxu0 0
  %1417 = vmatpush1.bf16.msra.mxu0 0
  %1418 = vmatprep.subr.bf16.mxu0 0
  %1419 = vmatpush1.bf16.msra.mxu0 0
  %1420 = vmatprep.subr.bf16.mxu0 0
  %1421 = vmatpush1.bf16.msra.mxu0 0
  %1422 = vmatprep.subr.bf16.mxu0 0
  %1423 = vmatpush1.bf16.msra.mxu0 0
  %1424 = vmatprep.subr.bf16.mxu0 0
  %1425 = vmatpush1.bf16.msra.mxu0 0
  %1426 = vmatprep.subr.bf16.mxu0 %v1363
  %1427 = vmatpush1.bf16.msra.mxu0 %v1360
  %1428 = vmatprep.subr.bf16.mxu0 0
  %1429 = vmatpush2.bf16.msra.mxu0 0
  %1430 = vmatprep.subr.bf16.mxu0 0
  %1431 = vmatpush2.bf16.msra.mxu0 0
  %1432 = vmatprep.subr.bf16.mxu0 0
  %1433 = vmatpush2.bf16.msra.mxu0 0
  %1434 = vmatprep.subr.bf16.mxu0 0
  %1435 = vmatpush2.bf16.msra.mxu0 0
  %1436 = vmatprep.subr.bf16.mxu0 0
  %1437 = vmatpush2.bf16.msra.mxu0 0
  %1438 = vmatprep.subr.bf16.mxu0 0
  %1439 = vmatpush2.bf16.msra.mxu0 0
  %1440 = vmatprep.subr.bf16.mxu0 0
  %1441 = vmatpush2.bf16.msra.mxu0 0
  %1442 = vmatprep.subr.bf16.mxu0 0
  %1443 = vmatpush2.bf16.msra.mxu0 0
  %1444 = vmatprep.mubr.bf16.mxu0 0
  %1445 = vmatmul.mubr.bf16.gmra.mxu0 %v1351
  %v1446 = vpop.f32.mrf.mxu0
  %v1447 = vadd.f32 0.0, %v1446
  %v1448 = vpop.f32.mrf.mxu0
  %v1449 = vadd.f32 0.0, %v1448
  %v1450 = vpop.f32.mrf.mxu0
  %v1451 = vpop.f32.mrf.mxu0
  %1452 = vdwg.mxu0
  %1453 = vmatprep.subr.bf16.mxu0 0
  %1454 = vmatpush1.bf16.msra.mxu0 0
  %1455 = vmatprep.subr.bf16.mxu0 0
  %1456 = vmatpush1.bf16.msra.mxu0 0
  %1457 = vmatprep.subr.bf16.mxu0 0
  %1458 = vmatpush1.bf16.msra.mxu0 0
  %1459 = vmatprep.subr.bf16.mxu0 0
  %1460 = vmatpush1.bf16.msra.mxu0 0
  %1461 = vmatprep.subr.bf16.mxu0 0
  %1462 = vmatpush1.bf16.msra.mxu0 0
  %1463 = vmatprep.subr.bf16.mxu0 0
  %1464 = vmatpush1.bf16.msra.mxu0 0
  %1465 = vmatprep.subr.bf16.mxu0 0
  %1466 = vmatpush1.bf16.msra.mxu0 0
  %1467 = vmatprep.subr.bf16.mxu0 %v1369
  %1468 = vmatpush1.bf16.msra.mxu0 %v1366
  %1469 = vmatprep.subr.bf16.mxu0 0
  %1470 = vmatpush2.bf16.msra.mxu0 0
  %1471 = vmatprep.subr.bf16.mxu0 0
  %1472 = vmatpush2.bf16.msra.mxu0 0
  %1473 = vmatprep.subr.bf16.mxu0 0
  %1474 = vmatpush2.bf16.msra.mxu0 0
  %1475 = vmatprep.subr.bf16.mxu0 0
  %1476 = vmatpush2.bf16.msra.mxu0 0
  %1477 = vmatprep.subr.bf16.mxu0 0
  %1478 = vmatpush2.bf16.msra.mxu0 0
  %1479 = vmatprep.subr.bf16.mxu0 0
  %1480 = vmatpush2.bf16.msra.mxu0 0
  %1481 = vmatprep.subr.bf16.mxu0 0
  %1482 = vmatpush2.bf16.msra.mxu0 0
  %1483 = vmatprep.subr.bf16.mxu0 0
  %1484 = vmatpush2.bf16.msra.mxu0 0
  %1485 = vmatprep.mubr.bf16.mxu0 0
  %1486 = vmatmul.mubr.bf16.gmra.mxu0 %v1351
  %v1487 = vpop.f32.mrf.mxu0
  %v1488 = vadd.f32 0.0, %v1487
  %v1489 = vpop.f32.mrf.mxu0
  %v1490 = vadd.f32 0.0, %v1489
  %v1491 = vpop.f32.mrf.mxu0
  %v1492 = vpop.f32.mrf.mxu0
  %1493 = vdwg.mxu0
  %v1494 = vadd.f32 %v1321, %v1406
  %v1495 = vadd.f32 %v1322, %v1408
  %v1496 = vadd.f32 %v1323, %v1447
  %v1497 = vadd.f32 %v1324, %v1449
  %v1498 = vadd.f32 %v1325, %v1488
  %v1499 = vadd.f32 %v1326, %v1490
  %s1500 = scalar_lea.vmem %s0, 32
  %v1501 = vld [vmem:[%s1500] sm:$0xf]
  %1502 = vrot.lane.b32.xlu0 %v122, 90
  %v1503 = vpop.permute.xlu0 %1502
  %1504 = vrot.lane.b32.xlu0 %v130, 90
  %v1505 = vpop.permute.xlu0 %1504
  %1506 = vrot.lane.b32.xlu0 %v129, 90
  %v1507 = vpop.permute.xlu0 %1506
  %1508 = vrot.lane.b32.xlu0 %v131, 90
  %v1509 = vpop.permute.xlu0 %1508
  %1510 = vrot.lane.b32.xlu0 %v138, 90
  %v1511 = vpop.permute.xlu0 %1510
  %1512 = vrot.lane.b32.xlu0 %v139, 90
  %v1513 = vpop.permute.xlu0 %1512
  %1514 = vrot.lane.b32.xlu0 %v147, 90
  %v1515 = vpop.permute.xlu0 %1514
  %vm1516 = vcmask 736256
  %v1517 = vsel %vm1516, %v1503, %v1505
  %v1518 = vsel %vm1516, %v1505, %v1507
  %v1519 = vsel %vm1516, %v1507, %v1509
  %v1520 = vsel %vm1516, %v1509, %v1511
  %v1521 = vsel %vm1516, %v1511, %v1513
  %v1522 = vsel %vm1516, %v1513, %v1515
  %v1524 = vsel %vm172, %v1501, 0
  %v1527 = vsel %vm176, %v1517, 0
  %v1530 = vsel %vm176, %v1518, 0
  %v1533 = vsel %vm176, %v1519, 0
  %v1536 = vsel %vm176, %v1520, 0
  %v1539 = vsel %vm176, %v1521, 0
  %v1542 = vsel %vm176, %v1522, 0
  %1544 = vmatprep.subr.bf16.mxu0 0
  %1545 = vmatpush1.bf16.msra.mxu0 0
  %1546 = vmatprep.subr.bf16.mxu0 0
  %1547 = vmatpush1.bf16.msra.mxu0 0
  %1548 = vmatprep.subr.bf16.mxu0 0
  %1549 = vmatpush1.bf16.msra.mxu0 0
  %1550 = vmatprep.subr.bf16.mxu0 0
  %1551 = vmatpush1.bf16.msra.mxu0 0
  %1552 = vmatprep.subr.bf16.mxu0 0
  %1553 = vmatpush1.bf16.msra.mxu0 0
  %1554 = vmatprep.subr.bf16.mxu0 0
  %1555 = vmatpush1.bf16.msra.mxu0 0
  %1556 = vmatprep.subr.bf16.mxu0 0
  %1557 = vmatpush1.bf16.msra.mxu0 0
  %1558 = vmatprep.subr.bf16.mxu0 %v1530
  %1559 = vmatpush1.bf16.msra.mxu0 %v1527
  %1560 = vmatprep.subr.bf16.mxu0 0
  %1561 = vmatpush2.bf16.msra.mxu0 0
  %1562 = vmatprep.subr.bf16.mxu0 0
  %1563 = vmatpush2.bf16.msra.mxu0 0
  %1564 = vmatprep.subr.bf16.mxu0 0
  %1565 = vmatpush2.bf16.msra.mxu0 0
  %1566 = vmatprep.subr.bf16.mxu0 0
  %1567 = vmatpush2.bf16.msra.mxu0 0
  %1568 = vmatprep.subr.bf16.mxu0 0
  %1569 = vmatpush2.bf16.msra.mxu0 0
  %1570 = vmatprep.subr.bf16.mxu0 0
  %1571 = vmatpush2.bf16.msra.mxu0 0
  %1572 = vmatprep.subr.bf16.mxu0 0
  %1573 = vmatpush2.bf16.msra.mxu0 0
  %1574 = vmatprep.subr.bf16.mxu0 0
  %1575 = vmatpush2.bf16.msra.mxu0 0
  %1576 = vmatprep.mubr.bf16.mxu0 0
  %1577 = vmatmul.mubr.bf16.gmra.mxu0 %v1524
  %v1578 = vpop.f32.mrf.mxu0
  %v1579 = vadd.f32 0.0, %v1578
  %v1580 = vpop.f32.mrf.mxu0
  %v1581 = vadd.f32 0.0, %v1580
  %v1582 = vpop.f32.mrf.mxu0
  %v1583 = vpop.f32.mrf.mxu0
  %1584 = vdwg.mxu0
  %1585 = vmatprep.subr.bf16.mxu0 0
  %1586 = vmatpush1.bf16.msra.mxu0 0
  %1587 = vmatprep.subr.bf16.mxu0 0
  %1588 = vmatpush1.bf16.msra.mxu0 0
  %1589 = vmatprep.subr.bf16.mxu0 0
  %1590 = vmatpush1.bf16.msra.mxu0 0
  %1591 = vmatprep.subr.bf16.mxu0 0
  %1592 = vmatpush1.bf16.msra.mxu0 0
  %1593 = vmatprep.subr.bf16.mxu0 0
  %1594 = vmatpush1.bf16.msra.mxu0 0
  %1595 = vmatprep.subr.bf16.mxu0 0
  %1596 = vmatpush1.bf16.msra.mxu0 0
  %1597 = vmatprep.subr.bf16.mxu0 0
  %1598 = vmatpush1.bf16.msra.mxu0 0
  %1599 = vmatprep.subr.bf16.mxu0 %v1536
  %1600 = vmatpush1.bf16.msra.mxu0 %v1533
  %1601 = vmatprep.subr.bf16.mxu0 0
  %1602 = vmatpush2.bf16.msra.mxu0 0
  %1603 = vmatprep.subr.bf16.mxu0 0
  %1604 = vmatpush2.bf16.msra.mxu0 0
  %1605 = vmatprep.subr.bf16.mxu0 0
  %1606 = vmatpush2.bf16.msra.mxu0 0
  %1607 = vmatprep.subr.bf16.mxu0 0
  %1608 = vmatpush2.bf16.msra.mxu0 0
  %1609 = vmatprep.subr.bf16.mxu0 0
  %1610 = vmatpush2.bf16.msra.mxu0 0
  %1611 = vmatprep.subr.bf16.mxu0 0
  %1612 = vmatpush2.bf16.msra.mxu0 0
  %1613 = vmatprep.subr.bf16.mxu0 0
  %1614 = vmatpush2.bf16.msra.mxu0 0
  %1615 = vmatprep.subr.bf16.mxu0 0
  %1616 = vmatpush2.bf16.msra.mxu0 0
  %1617 = vmatprep.mubr.bf16.mxu0 0
  %1618 = vmatmul.mubr.bf16.gmra.mxu0 %v1524
  %v1619 = vpop.f32.mrf.mxu0
  %v1620 = vadd.f32 0.0, %v1619
  %v1621 = vpop.f32.mrf.mxu0
  %v1622 = vadd.f32 0.0, %v1621
  %v1623 = vpop.f32.mrf.mxu0
  %v1624 = vpop.f32.mrf.mxu0
  %1625 = vdwg.mxu0
  %1626 = vmatprep.subr.bf16.mxu0 0
  %1627 = vmatpush1.bf16.msra.mxu0 0
  %1628 = vmatprep.subr.bf16.mxu0 0
  %1629 = vmatpush1.bf16.msra.mxu0 0
  %1630 = vmatprep.subr.bf16.mxu0 0
  %1631 = vmatpush1.bf16.msra.mxu0 0
  %1632 = vmatprep.subr.bf16.mxu0 0
  %1633 = vmatpush1.bf16.msra.mxu0 0
  %1634 = vmatprep.subr.bf16.mxu0 0
  %1635 = vmatpush1.bf16.msra.mxu0 0
  %1636 = vmatprep.subr.bf16.mxu0 0
  %1637 = vmatpush1.bf16.msra.mxu0 0
  %1638 = vmatprep.subr.bf16.mxu0 0
  %1639 = vmatpush1.bf16.msra.mxu0 0
  %1640 = vmatprep.subr.bf16.mxu0 %v1542
  %1641 = vmatpush1.bf16.msra.mxu0 %v1539
  %1642 = vmatprep.subr.bf16.mxu0 0
  %1643 = vmatpush2.bf16.msra.mxu0 0
  %1644 = vmatprep.subr.bf16.mxu0 0
  %1645 = vmatpush2.bf16.msra.mxu0 0
  %1646 = vmatprep.subr.bf16.mxu0 0
  %1647 = vmatpush2.bf16.msra.mxu0 0
  %1648 = vmatprep.subr.bf16.mxu0 0
  %1649 = vmatpush2.bf16.msra.mxu0 0
  %1650 = vmatprep.subr.bf16.mxu0 0
  %1651 = vmatpush2.bf16.msra.mxu0 0
  %1652 = vmatprep.subr.bf16.mxu0 0
  %1653 = vmatpush2.bf16.msra.mxu0 0
  %1654 = vmatprep.subr.bf16.mxu0 0
  %1655 = vmatpush2.bf16.msra.mxu0 0
  %1656 = vmatprep.subr.bf16.mxu0 0
  %1657 = vmatpush2.bf16.msra.mxu0 0
  %1658 = vmatprep.mubr.bf16.mxu0 0
  %1659 = vmatmul.mubr.bf16.gmra.mxu0 %v1524
  %v1660 = vpop.f32.mrf.mxu0
  %v1661 = vadd.f32 0.0, %v1660
  %v1662 = vpop.f32.mrf.mxu0
  %v1663 = vadd.f32 0.0, %v1662
  %v1664 = vpop.f32.mrf.mxu0
  %v1665 = vpop.f32.mrf.mxu0
  %1666 = vdwg.mxu0
  %v1667 = vadd.f32 %v1494, %v1579
  %v1668 = vadd.f32 %v1495, %v1581
  %v1669 = vadd.f32 %v1496, %v1620
  %v1670 = vadd.f32 %v1497, %v1622
  %v1671 = vadd.f32 %v1498, %v1661
  %v1672 = vadd.f32 %v1499, %v1663
  %v1673 = vpack.c.bf16 %v1667, %v1667
  %v1674 = vpack.c.bf16 %v1668, %v1668
  %v1675 = vpack.c.bf16 %v1669, %v1669
  %v1676 = vpack.c.bf16 %v1670, %v1670
  %v1677 = vpack.c.bf16 %v1671, %v1671
  %v1678 = vpack.c.bf16 %v1672, %v1672
  %v1685 = vunpack.c.l.b16 %v1673
  %v1686 = vunpack.c.l.b16 %v1674
  %v1687 = vunpack.c.l.b16 %v1675
  %v1688 = vunpack.c.l.b16 %v1676
  %v1689 = vunpack.c.l.b16 %v1677
  %v1690 = vunpack.c.l.b16 %v1678
  %v1691 = vpack.c.b16 %v1686, %v1685
  %v1692 = vpack.c.b16 %v1688, %v1687
  %v1693 = vpack.c.b16 %v1690, %v1689
  %1697 = vst [vmem:[%s99] sm:$0xff] %v1691
  %1698 = vst [vmem:[%s99 + $0x8] sm:$0xff] %v1692
  %1699 = vst [vmem:[%s99 + $0x10] sm:$0xff] %v1693
  %v1700 = vunpack.c.l.bf16 %v1673
  %v1701 = vunpack.c.l.bf16 %v1674
  %v1702 = vunpack.c.l.bf16 %v1675
  %v1703 = vunpack.c.l.bf16 %v1676
  %v1704 = vunpack.c.l.bf16 %v1677
  %v1705 = vunpack.c.l.bf16 %v1678
  %v1706 = vld [vmem:[%s91] sm:$0x3f]
  %v1708 = vlaneseq
  %v1709 = vshrl.u32 %v1708, 7
  %v1710 = vsub.s32 0, %v1709
  %v1711 = vrot.slane %v1706, %v1710
  %v1712 = vlaneseq
  %v1713 = vshrl.u32 %v1712, 7
  %v1714 = vsub.s32 1, %v1713
  %v1715 = vrot.slane %v1706, %v1714
  %v1716 = vlaneseq
  %v1717 = vshrl.u32 %v1716, 7
  %v1718 = vsub.s32 2, %v1717
  %v1719 = vrot.slane %v1706, %v1718
  %v1720 = vlaneseq
  %v1721 = vshrl.u32 %v1720, 7
  %v1722 = vsub.s32 3, %v1721
  %v1723 = vrot.slane %v1706, %v1722
  %v1724 = vlaneseq
  %v1725 = vshrl.u32 %v1724, 7
  %v1726 = vsub.s32 4, %v1725
  %v1727 = vrot.slane %v1706, %v1726
  %v1728 = vlaneseq
  %v1729 = vshrl.u32 %v1728, 7
  %v1730 = vsub.s32 5, %v1729
  %v1731 = vrot.slane %v1706, %v1730
  %v1738 = vmul.f32 %v1700, %v1711
  %v1739 = vmul.f32 %v1701, %v1715
  %v1740 = vmul.f32 %v1702, %v1719
  %v1741 = vmul.f32 %v1703, %v1723
  %v1742 = vmul.f32 %v1704, %v1727
  %v1743 = vmul.f32 %v1705, %v1731
  %v1744 = vld [vmem:[%s5] sm:$0xff]
  %v1745 = vadd.f32 %v1738, %v1739
  %v1746 = vadd.f32 %v1745, %v1740
  %v1747 = vadd.f32 %v1746, %v1741
  %v1748 = vadd.f32 %v1747, %v1742
  %v1749 = vadd.f32 %v1748, %v1743
  %1750 = vadd.xlane.f32.xlu0 %v1749
  %v1751 = vpop.xlane.xlu0 %1750
  %v1752 = vadd.f32 %v1744, %v1751
  %vm1753 = vcmask 7168
  %1754 = vst.msk [vmem:[%s5] sm:$0xff] %vm1753, %v1752
  %v1755 = vld [vmem:[%s6] sm:$0xff]
  %v1756 = vmul.f32 %v1738, %v1700
  %v1757 = vmul.f32 %v1739, %v1701
  %v1758 = vmul.f32 %v1740, %v1702
  %v1759 = vmul.f32 %v1741, %v1703
  %v1760 = vmul.f32 %v1742, %v1704
  %v1761 = vmul.f32 %v1743, %v1705
  %v1762 = vadd.f32 %v1756, %v1757
  %v1763 = vadd.f32 %v1762, %v1758
  %v1764 = vadd.f32 %v1763, %v1759
  %v1765 = vadd.f32 %v1764, %v1760
  %v1766 = vadd.f32 %v1765, %v1761
  %1767 = vadd.xlane.f32.xlu0 %v1766
  %v1768 = vpop.xlane.xlu0 %1767
  %v1769 = vadd.f32 %v1755, %v1768
  %1770 = vst.msk [vmem:[%s6] sm:$0xff] %vm1753, %v1769
  %s1771 = sadd.s32 0, 0
  %s1772 = smul.u32 6, %s1771
  %p1773 = scmp.lt.s32.totalorder %s1772, 5
  %s1774 = scalar_select %p1773, %s1772, 5
  %s1775 = smul.addr %s1774, 4
  %s1776 = scalar_lea.vmem %s4, %s1775
  // Predicated region
  $region22: #{conv_bn_silu.2} parent=0 // pred_check
    _
  $region23: #{conv_bn_silu.2} parent=0 // pred_check_branch
    %1778 = sbr.rel (0) target = $region25
  $region24: #{conv_bn_silu.2} parent=0 // pred_region
    %s1779 = sadd.s32 0, 0
    %s1780 = smul.u32 6, %s1779
  $region25: #{conv_bn_silu.2} parent=0 // pred_fallthru
    _
  // Predicated region
  $region26: #{conv_bn_silu.2} parent=0 // pred_check
    _
  $region27: #{conv_bn_silu.2} parent=0 // pred_check_branch
    %1782 = sbr.rel (0) target = $region29
  $region28: #{conv_bn_silu.2} parent=0 // pred_region
    _
  $region29: #{conv_bn_silu.2} parent=0 // pred_fallthru
    _
  // Predicated region
  $region30: #{conv_bn_silu.2} parent=0 // pred_check
    _
  $region31: #{conv_bn_silu.2} parent=0 // pred_check_branch
    %1784 = sbr.rel (0) target = $region33
  $region32: #{conv_bn_silu.2} parent=0 // pred_region
    _
  $region33: #{conv_bn_silu.2} parent=0 // pred_fallthru
    _
  // Predicated region
  $region34: #{conv_bn_silu.2} parent=0 // pred_check
    _
  $region35: #{conv_bn_silu.2} parent=0 // pred_check_branch
    %1786 = sbr.rel (0) target = $region37
  $region36: #{conv_bn_silu.2} parent=0 // pred_region
    %s1787 = sadd.s32 0, 0
    %s1788 = smul.u32 6, %s1787
    %p1789 = scmp.lt.s32.totalorder %s1788, 5
    %s1790 = scalar_select %p1789, %s1788, 5
    %s1791 = smul.addr %s1790, 4
    %s1792 = scalar_lea.vmem %s4, %s1791
  $region37: #{conv_bn_silu.2} parent=0 // pred_fallthru
    _
  // Predicated region
  $region38: #{conv_bn_silu.2} parent=0 // pred_check
    _
  $region39: #{conv_bn_silu.2} parent=0 // pred_check_branch
    %1794 = sbr.rel (0) target = $region41
  $region40: #{conv_bn_silu.2} parent=0 // pred_region
    _
  $region41: #{conv_bn_silu.2} parent=0 // pred_fallthru
    _
  // Predicated region
  $region42: #{conv_bn_silu.2} parent=0 // pred_check
    _
  $region43: #{conv_bn_silu.2} parent=0 // pred_check_branch
    %1796 = sbr.rel (0) target = $region45
  $region44: #{conv_bn_silu.2} parent=0 // pred_region
    _
  $region45: #{conv_bn_silu.2} parent=0 // pred_fallthru
    _

</llo_original>
